<compile_context>
chip_gen: v7x
topology: tpu7x:2x2x1
jax: 0.10.0
libtpu: 0.0.40
codegen_flags: <defaults>
</compile_context>

<pallas_src>
import functools

import jax
import jax.numpy as jnp
from jax import lax
from jax.experimental import pallas as pl
from jax.experimental.pallas import tpu as pltpu


def _silu(x):
    return x * jax.nn.sigmoid(x)


def _visnet_kernel(z_ref, batch_ref, pos_ref,
                   table_ref, w1_ref, b1_ref, w2_ref, b2_ref,
                   w3a_ref, w3b_ref, b3_ref, w4_ref,
                   scalars_ref,
                   out_ref,
                   acc_ref, cnt_ref,
                   *, num_types_pad, b_pad):
    i = pl.program_id(0)

    @pl.when(i == 0)
    def _():
        acc_ref[...] = jnp.zeros_like(acc_ref)
        cnt_ref[...] = jnp.zeros_like(cnt_ref)

    tile_n = z_ref.shape[0]

    # ---- in-kernel embedding gather: one-hot(z) @ resident table ----------
    z_t = z_ref[...]                                               # [T, 1] int32
    t_iota = lax.broadcasted_iota(jnp.int32, (tile_n, num_types_pad), 1)
    z_oh = (z_t == t_iota).astype(jnp.float32)                     # [T, Tz]
    emb = jnp.dot(z_oh, table_ref[...],
                  preferred_element_type=jnp.float32)              # [T, H]

    # ---- representation MLP ------------------------------------------------
    h = _silu(jnp.dot(emb, w1_ref[...],
                      preferred_element_type=jnp.float32) + b1_ref[...])
    x = jnp.dot(h, w2_ref[...],
                preferred_element_type=jnp.float32) + b2_ref[...]  # [T, H]

    pos_t = pos_ref[...]                                           # [T, 3]
    pos_sq = jnp.sum(pos_t * pos_t, axis=-1, keepdims=True)        # [T, 1]
    vec_norm = pos_sq * (x * x)                                    # [T, H]

    # ---- gated-equivariant head (pre_reduce) -------------------------------
    g = _silu(jnp.dot(x, w3a_ref[...], preferred_element_type=jnp.float32)
              + jnp.dot(vec_norm, w3b_ref[...], preferred_element_type=jnp.float32)
              + b3_ref[...])                                       # [T, H]

    # ---- fused scatter-add: segmented reduce of g over molecules -----------
    b_t = batch_ref[...]                                           # [T, 1] int32
    m_iota = lax.broadcasted_iota(jnp.int32, (tile_n, b_pad), 1)
    m_oh = (b_t == m_iota).astype(jnp.float32)                     # [T, B_pad]

    # acc[h, b] += sum_i g[i, h] * onehot[i, b]
    acc_ref[...] += lax.dot_general(
        g, m_oh, (((0,), (0,)), ((), ())),
        preferred_element_type=jnp.float32)                        # [H, B_pad]
    cnt_ref[...] += jnp.sum(m_oh, axis=0, keepdims=True)           # [1, B_pad]

    # ---- finalize: tiny per-molecule head, lane-dense output ---------------
    @pl.when(i == pl.num_programs(0) - 1)
    def _():
        e = jnp.dot(w4_ref[...], acc_ref[...],
                    preferred_element_type=jnp.float32)            # [1, B_pad]
        # scalars = [std * b4, mean]
        out_ref[...] = e + scalars_ref[0] * cnt_ref[...] + scalars_ref[1]


def visnet_forward(z, pos, batch, params, num_molecules, *, tile_n=256):
    """Pad/pack inputs and run the tiled kernel. Returns (out[B,1], None)."""
    n_atoms = z.shape[0]
    hidden = params["w1"].shape[0]
    num_types = params["embedding"].shape[0]

    num_types_pad = pl.cdiv(num_types, 128) * 128          # lane-aligned table
    b_pad = pl.cdiv(num_molecules, 128) * 128              # lane-dense output row

    n_round = pl.cdiv(n_atoms, 8) * 8
    tile_n = max(8, (min(tile_n, n_round) // 8) * 8)       # multiple of 8
    n_tiles = pl.cdiv(n_atoms, tile_n)
    n_pad = n_tiles * tile_n

    # Pad per-atom arrays. Padded atoms get batch id == b_pad so they match no
    # molecule column and contribute nothing to the reduction.
    z_p = jnp.zeros((n_pad, 1), jnp.int32).at[:n_atoms, 0].set(z.astype(jnp.int32))
    batch_p = jnp.full((n_pad, 1), b_pad, jnp.int32).at[:n_atoms, 0].set(
        batch.astype(jnp.int32))
    pos_p = jnp.zeros((n_pad, 3), jnp.float32).at[:n_atoms].set(pos)

    table_p = jnp.zeros((num_types_pad, hidden), jnp.float32).at[:num_types].set(
        params["embedding"])

    # Fold std into the head weights at trace time; keep (std*b4, mean) in SMEM.
    std = params["std"].reshape(())
    w4_eff = (params["w4"] * std).reshape(1, hidden)
    scalars = jnp.stack([params["b4"].reshape(()) * std,
                         params["mean"].reshape(())]).astype(jnp.float32)

    resident2 = lambda shape: pl.BlockSpec(shape, lambda i: (0, 0))
    per_atom = lambda last: pl.BlockSpec((tile_n, last), lambda i: (i, 0))

    grid_spec = pltpu.PrefetchScalarGridSpec(
        num_scalar_prefetch=0,
        grid=(n_tiles,),
        in_specs=[
            per_atom(1),                                   # z ids
            per_atom(1),                                   # batch ids
            per_atom(3),                                   # positions
            resident2((num_types_pad, hidden)),            # embedding table
            resident2((hidden, hidden)),                   # w1
            resident2((1, hidden)),                        # b1
            resident2((hidden, hidden)),                   # w2
            resident2((1, hidden)),                        # b2
            resident2((hidden, hidden)),                   # w3a
            resident2((hidden, hidden)),                   # w3b
            resident2((1, hidden)),                        # b3
            resident2((1, hidden)),                        # w4 * std
            pl.BlockSpec(memory_space=pltpu.MemorySpace.SMEM),  # [std*b4, mean]
        ],
        out_specs=pl.BlockSpec((1, b_pad), lambda i: (0, 0)),
        scratch_shapes=[
            pltpu.VMEM((hidden, b_pad), jnp.float32),      # per-molecule acc
            pltpu.VMEM((1, b_pad), jnp.float32),           # per-molecule counts
        ],
    )

    kernel = functools.partial(_visnet_kernel,
                               num_types_pad=num_types_pad, b_pad=b_pad)

    out_row = pl.pallas_call(
        kernel,
        grid_spec=grid_spec,
        out_shape=jax.ShapeDtypeStruct((1, b_pad), jnp.float32),
        compiler_params=pltpu.CompilerParams(
            # atom axis reduces into the shared accumulator -> "arbitrary".
            dimension_semantics=("arbitrary",)),
    )(z_p, batch_p, pos_p, table_p,
      params["w1"], params["b1"], params["w2"], params["b2"],
      params["w3a"], params["w3b"], params["b3"], w4_eff, scalars)

    out = out_row[0, :num_molecules].reshape(num_molecules, 1)
    return out, None  # derivative=False -> (out, None), matching PyTorch return


def _reference(z, pos, batch, params, num_molecules):
    """Pure-JAX reference of the same math (high-precision matmuls)."""
    hp = lax.Precision.HIGHEST
    emb = params["embedding"][z]
    h = _silu(jnp.dot(emb, params["w1"], precision=hp) + params["b1"])
    x = jnp.dot(h, params["w2"], precision=hp) + params["b2"]
    pos_sq = jnp.sum(pos * pos, axis=-1, keepdims=True)
    vec_norm = pos_sq * (x * x)
    g = _silu(jnp.dot(x, params["w3a"], precision=hp)
              + jnp.dot(vec_norm, params["w3b"], precision=hp) + params["b3"])
    y = jnp.sum(g * params["w4"], axis=-1, keepdims=True) + params["b4"][0, 0]
    y = y * params["std"][0, 0]
    onehot = (batch[None, :] == jnp.arange(num_molecules)[:, None]).astype(jnp.float32)
    out = jnp.dot(onehot, y, precision=hp) + params["mean"][0, 0]
    return out


def make_params(key, num_types=10, hidden=128):
    ks = jax.random.split(key, 8)
    s = 0.1
    return {
        "embedding": s * jax.random.normal(ks[0], (num_types, hidden), jnp.float32),
        "w1": s * jax.random.normal(ks[1], (hidden, hidden), jnp.float32),
        "b1": 0.01 * jax.random.normal(ks[6], (1, hidden), jnp.float32),
        "w2": s * jax.random.normal(ks[2], (hidden, hidden), jnp.float32),
        "b2": jnp.zeros((1, hidden), jnp.float32),
        "w3a": s * jax.random.normal(ks[3], (hidden, hidden), jnp.float32),
        "w3b": s * jax.random.normal(ks[4], (hidden, hidden), jnp.float32),
        "b3": 0.01 * jax.random.normal(ks[7], (1, hidden), jnp.float32),
        "w4": s * jax.random.normal(ks[5], (1, hidden), jnp.float32),
        "b4": 0.1 * jnp.ones((1, 1), jnp.float32),
        "std": 2.0 * jnp.ones((1, 1), jnp.float32),    # registered buffer `std`
        "mean": 0.5 * jnp.ones((1, 1), jnp.float32),   # registered buffer `mean`
    }


if __name__ == "__main__":
    key = jax.random.PRNGKey(0)
    k_param, k_pos, k_z = jax.random.split(key, 3)

    N_ATOMS = 24         # total atoms across the batch
    HIDDEN = 128         # lane-dense feature width
    N_MOL = 2            # molecules in the batch
    TILE_N = 8           # small atom tile so the demo exercises a 3-step grid

    params = make_params(k_param, num_types=10, hidden=HIDDEN)
    z = jax.random.randint(k_z, (N_ATOMS,), 1, 10)                     # atomic numbers
    pos = jax.random.normal(k_pos, (N_ATOMS, 3), jnp.float32)          # coordinates
    batch = jnp.concatenate([jnp.zeros((12,), jnp.int32),
                             jnp.ones((12,), jnp.int32)])              # atom -> molecule

    out, forces = visnet_forward(z, pos, batch, params, N_MOL, tile_n=TILE_N)
    out = jax.block_until_ready(out)

    ref = _reference(z, pos, batch, params, N_MOL)
    assert out.shape == (N_MOL, 1), out.shape
    assert jnp.allclose(out, ref, atol=1e-4, rtol=1e-4), (out, ref)
    print("KERNEL_OK")
</pallas_src>

<mosaic_0001>
module attributes {stable_mosaic.version = 11 : i64} {
  func.func @_visnet_kernel(%arg0: i32, %arg1: memref<8x1xi32, #tpu.memory_space<vmem>>, %arg2: memref<8x1xi32, #tpu.memory_space<vmem>>, %arg3: memref<8x3xf32, #tpu.memory_space<vmem>>, %arg4: memref<128x128xf32, #tpu.memory_space<vmem>>, %arg5: memref<128x128xf32, #tpu.memory_space<vmem>>, %arg6: memref<1x128xf32, #tpu.memory_space<vmem>>, %arg7: memref<128x128xf32, #tpu.memory_space<vmem>>, %arg8: memref<1x128xf32, #tpu.memory_space<vmem>>, %arg9: memref<128x128xf32, #tpu.memory_space<vmem>>, %arg10: memref<128x128xf32, #tpu.memory_space<vmem>>, %arg11: memref<1x128xf32, #tpu.memory_space<vmem>>, %arg12: memref<1x128xf32, #tpu.memory_space<vmem>>, %arg13: memref<2xf32, #tpu.memory_space<smem>>, %arg14: memref<1x128xf32, #tpu.memory_space<vmem>>, %arg15: memref<128x128xf32, #tpu.memory_space<vmem>>, %arg16: memref<1x128xf32, #tpu.memory_space<vmem>>) attributes {dimension_semantics = [#tpu.dimension_semantics<arbitrary>], iteration_bounds = array<i64: 3>, scalar_prefetch = 0 : i64, scratch_operands = 2 : i64, tpu.core_type = #tpu.core_type<tc>, window_params = [{transform_indices = @transform_0, window_bounds = array<i64: 8, 1>}, {transform_indices = @transform_1, window_bounds = array<i64: 8, 1>}, {transform_indices = @transform_2, window_bounds = array<i64: 8, 3>}, {pipeline_mode = #tpu.pipeline_mode<synchronous>, transform_indices = @transform_3, window_bounds = array<i64: 128, 128>}, {pipeline_mode = #tpu.pipeline_mode<synchronous>, transform_indices = @transform_4, window_bounds = array<i64: 128, 128>}, {pipeline_mode = #tpu.pipeline_mode<synchronous>, transform_indices = @transform_5, window_bounds = array<i64: 1, 128>}, {pipeline_mode = #tpu.pipeline_mode<synchronous>, transform_indices = @transform_6, window_bounds = array<i64: 128, 128>}, {pipeline_mode = #tpu.pipeline_mode<synchronous>, transform_indices = @transform_7, window_bounds = array<i64: 1, 128>}, {pipeline_mode = #tpu.pipeline_mode<synchronous>, transform_indices = @transform_8, window_bounds = array<i64: 128, 128>}, {pipeline_mode = #tpu.pipeline_mode<synchronous>, transform_indices = @transform_9, window_bounds = array<i64: 128, 128>}, {pipeline_mode = #tpu.pipeline_mode<synchronous>, transform_indices = @transform_10, window_bounds = array<i64: 1, 128>}, {pipeline_mode = #tpu.pipeline_mode<synchronous>, transform_indices = @transform_11, window_bounds = array<i64: 1, 128>}, {transform_indices = @transform_12, window_bounds = array<i64: 2>}, {pipeline_mode = #tpu.pipeline_mode<synchronous>, transform_indices = @transform_13, window_bounds = array<i64: 1, 128>}]} {
    %c0_i32 = arith.constant 0 : i32
    %0 = arith.cmpi eq, %arg0, %c0_i32 : i32
    %1 = arith.extui %0 : i1 to i32
    %c0_i32_0 = arith.constant 0 : i32
    %2 = arith.cmpi ne, %1, %c0_i32_0 : i32
    scf.if %2 {
      %cst_40 = arith.constant 0.000000e+00 : f32
      %66 = vector.broadcast %cst_40 : f32 to vector<128x128xf32>
      %c0_41 = arith.constant 0 : index
      %c0_42 = arith.constant 0 : index
      %67 = vector.load %arg15[%c0_41, %c0_42] : memref<128x128xf32, #tpu.memory_space<vmem>>, vector<128x128xf32>
      tpu.vector_store %arg15[%c0_41, %c0_42], %66 {strides = array<i32>} : memref<128x128xf32, #tpu.memory_space<vmem>>, vector<128x128xf32>,
      %cst_43 = arith.constant 0.000000e+00 : f32
      %68 = vector.broadcast %cst_43 : f32 to vector<1x128xf32>
      %c0_44 = arith.constant 0 : index
      %c0_45 = arith.constant 0 : index
      %69 = vector.load %arg16[%c0_44, %c0_45] : memref<1x128xf32, #tpu.memory_space<vmem>>, vector<1x128xf32>
      tpu.vector_store %arg16[%c0_44, %c0_45], %68 {strides = array<i32>} : memref<1x128xf32, #tpu.memory_space<vmem>>, vector<1x128xf32>,
    } else {
    }
    %c0 = arith.constant 0 : index
    %c0_1 = arith.constant 0 : index
    %3 = vector.load %arg1[%c0, %c0_1] : memref<8x1xi32, #tpu.memory_space<vmem>>, vector<8x1xi32>
    %4 = tpu.iota {dimensions = array<i32: 1>} : vector<8x128xi32>
    %5 = vector.broadcast %3 : vector<8x1xi32> to vector<8x128xi32>
    %6 = arith.cmpi eq, %5, %4 : vector<8x128xi32>
    %7 = arith.extui %6 : vector<8x128xi1> to vector<8x128xi32>
    %8 = arith.sitofp %7 : vector<8x128xi32> to vector<8x128xf32>
    %c0_2 = arith.constant 0 : index
    %c0_3 = arith.constant 0 : index
    %9 = vector.load %arg4[%c0_2, %c0_3] : memref<128x128xf32, #tpu.memory_space<vmem>>, vector<128x128xf32>
    %cst = arith.constant dense<0.000000e+00> : vector<8x128xf32>
    %10 = tpu.matmul %8, %9, %cst {dimension_numbers = #tpu.dot_dimension_numbers<[1], [0], [0], [1], [0, 0, 1, 1], [], []>} : vector<8x128xf32>, vector<128x128xf32>, vector<8x128xf32> -> vector<8x128xf32>
    %c0_4 = arith.constant 0 : index
    %c0_5 = arith.constant 0 : index
    %11 = vector.load %arg5[%c0_4, %c0_5] : memref<128x128xf32, #tpu.memory_space<vmem>>, vector<128x128xf32>
    %cst_6 = arith.constant dense<0.000000e+00> : vector<8x128xf32>
    %12 = tpu.matmul %10, %11, %cst_6 {dimension_numbers = #tpu.dot_dimension_numbers<[1], [0], [0], [1], [0, 0, 1, 1], [], []>} : vector<8x128xf32>, vector<128x128xf32>, vector<8x128xf32> -> vector<8x128xf32>
    %c0_7 = arith.constant 0 : index
    %c0_8 = arith.constant 0 : index
    %13 = vector.load %arg6[%c0_7, %c0_8] : memref<1x128xf32, #tpu.memory_space<vmem>>, vector<1x128xf32>
    %14 = vector.broadcast %13 : vector<1x128xf32> to vector<8x128xf32>
    %15 = arith.addf %12, %14 : vector<8x128xf32>
    %16 = arith.negf %15 : vector<8x128xf32>
    %17 = math.exp %16 : vector<8x128xf32>
    %cst_9 = arith.constant 1.000000e+00 : f32
    %18 = vector.broadcast %cst_9 : f32 to vector<8x128xf32>
    %19 = arith.addf %18, %17 : vector<8x128xf32>
    %20 = arith.divf %18, %19 : vector<8x128xf32>
    %21 = arith.mulf %15, %20 : vector<8x128xf32>
    %c0_10 = arith.constant 0 : index
    %c0_11 = arith.constant 0 : index
    %22 = vector.load %arg7[%c0_10, %c0_11] : memref<128x128xf32, #tpu.memory_space<vmem>>, vector<128x128xf32>
    %cst_12 = arith.constant dense<0.000000e+00> : vector<8x128xf32>
    %23 = tpu.matmul %21, %22, %cst_12 {dimension_numbers = #tpu.dot_dimension_numbers<[1], [0], [0], [1], [0, 0, 1, 1], [], []>} : vector<8x128xf32>, vector<128x128xf32>, vector<8x128xf32> -> vector<8x128xf32>
    %c0_13 = arith.constant 0 : index
    %c0_14 = arith.constant 0 : index
    %24 = vector.load %arg8[%c0_13, %c0_14] : memref<1x128xf32, #tpu.memory_space<vmem>>, vector<1x128xf32>
    %25 = vector.broadcast %24 : vector<1x128xf32> to vector<8x128xf32>
    %26 = arith.addf %23, %25 : vector<8x128xf32>
    %c0_15 = arith.constant 0 : index
    %c0_16 = arith.constant 0 : index
    %27 = vector.load %arg3[%c0_15, %c0_16] : memref<8x3xf32, #tpu.memory_space<vmem>>, vector<8x3xf32>
    %28 = arith.mulf %27, %27 : vector<8x3xf32>
    %cst_17 = arith.constant dense<0.000000e+00> : vector<8xf32>
    %29 = vector.multi_reduction <add>, %28, %cst_17 [1] : vector<8x3xf32> to vector<8xf32>
    %30 = vector.shape_cast %29 : vector<8xf32> to vector<8x1xf32>
    %31 = arith.mulf %26, %26 : vector<8x128xf32>
    %32 = vector.broadcast %30 : vector<8x1xf32> to vector<8x128xf32>
    %33 = arith.mulf %32, %31 : vector<8x128xf32>
    %c0_18 = arith.constant 0 : index
    %c0_19 = arith.constant 0 : index
    %34 = vector.load %arg9[%c0_18, %c0_19] : memref<128x128xf32, #tpu.memory_space<vmem>>, vector<128x128xf32>
    %cst_20 = arith.constant dense<0.000000e+00> : vector<8x128xf32>
    %35 = tpu.matmul %26, %34, %cst_20 {dimension_numbers = #tpu.dot_dimension_numbers<[1], [0], [0], [1], [0, 0, 1, 1], [], []>} : vector<8x128xf32>, vector<128x128xf32>, vector<8x128xf32> -> vector<8x128xf32>
    %c0_21 = arith.constant 0 : index
    %c0_22 = arith.constant 0 : index
    %36 = vector.load %arg10[%c0_21, %c0_22] : memref<128x128xf32, #tpu.memory_space<vmem>>, vector<128x128xf32>
    %cst_23 = arith.constant dense<0.000000e+00> : vector<8x128xf32>
    %37 = tpu.matmul %33, %36, %cst_23 {dimension_numbers = #tpu.dot_dimension_numbers<[1], [0], [0], [1], [0, 0, 1, 1], [], []>} : vector<8x128xf32>, vector<128x128xf32>, vector<8x128xf32> -> vector<8x128xf32>
    %38 = arith.addf %35, %37 : vector<8x128xf32>
    %c0_24 = arith.constant 0 : index
    %c0_25 = arith.constant 0 : index
    %39 = vector.load %arg11[%c0_24, %c0_25] : memref<1x128xf32, #tpu.memory_space<vmem>>, vector<1x128xf32>
    %40 = vector.broadcast %39 : vector<1x128xf32> to vector<8x128xf32>
    %41 = arith.addf %38, %40 : vector<8x128xf32>
    %42 = arith.negf %41 : vector<8x128xf32>
    %43 = math.exp %42 : vector<8x128xf32>
    %cst_26 = arith.constant 1.000000e+00 : f32
    %44 = vector.broadcast %cst_26 : f32 to vector<8x128xf32>
    %45 = arith.addf %44, %43 : vector<8x128xf32>
    %46 = arith.divf %44, %45 : vector<8x128xf32>
    %47 = arith.mulf %41, %46 : vector<8x128xf32>
    %c0_27 = arith.constant 0 : index
    %c0_28 = arith.constant 0 : index
    %48 = vector.load %arg2[%c0_27, %c0_28] : memref<8x1xi32, #tpu.memory_space<vmem>>, vector<8x1xi32>
    %49 = tpu.iota {dimensions = array<i32: 1>} : vector<8x128xi32>
    %50 = vector.broadcast %48 : vector<8x1xi32> to vector<8x128xi32>
    %51 = arith.cmpi eq, %50, %49 : vector<8x128xi32>
    %52 = arith.extui %51 : vector<8x128xi1> to vector<8x128xi32>
    %53 = arith.sitofp %52 : vector<8x128xi32> to vector<8x128xf32>
    %c0_29 = arith.constant 0 : index
    %c0_30 = arith.constant 0 : index
    %54 = vector.load %arg15[%c0_29, %c0_30] : memref<128x128xf32, #tpu.memory_space<vmem>>, vector<128x128xf32>
    %cst_31 = arith.constant dense<0.000000e+00> : vector<128x128xf32>
    %55 = tpu.matmul %47, %53, %cst_31 {dimension_numbers = #tpu.dot_dimension_numbers<[0], [0], [1], [1], [0, 1, 1, 1], [], []>} : vector<8x128xf32>, vector<8x128xf32>, vector<128x128xf32> -> vector<128x128xf32>
    %56 = arith.addf %54, %55 : vector<128x128xf32>
    %c0_32 = arith.constant 0 : index
    %c0_33 = arith.constant 0 : index
    %57 = vector.load %arg15[%c0_32, %c0_33] : memref<128x128xf32, #tpu.memory_space<vmem>>, vector<128x128xf32>
    tpu.vector_store %arg15[%c0_32, %c0_33], %56 {strides = array<i32>} : memref<128x128xf32, #tpu.memory_space<vmem>>, vector<128x128xf32>,
    %c0_34 = arith.constant 0 : index
    %c0_35 = arith.constant 0 : index
    %58 = vector.load %arg16[%c0_34, %c0_35] : memref<1x128xf32, #tpu.memory_space<vmem>>, vector<1x128xf32>
    %cst_36 = arith.constant dense<0.000000e+00> : vector<128xf32>
    %59 = vector.multi_reduction <add>, %53, %cst_36 [0] : vector<8x128xf32> to vector<128xf32>
    %60 = vector.shape_cast %59 : vector<128xf32> to vector<1x128xf32>
    %61 = arith.addf %58, %60 : vector<1x128xf32>
    %c0_37 = arith.constant 0 : index
    %c0_38 = arith.constant 0 : index
    %62 = vector.load %arg16[%c0_37, %c0_38] : memref<1x128xf32, #tpu.memory_space<vmem>>, vector<1x128xf32>
    tpu.vector_store %arg16[%c0_37, %c0_38], %61 {strides = array<i32>} : memref<1x128xf32, #tpu.memory_space<vmem>>, vector<1x128xf32>,
    %c2_i32 = arith.constant 2 : i32
    %63 = arith.cmpi eq, %arg0, %c2_i32 : i32
    %64 = arith.extui %63 : i1 to i32
    %c0_i32_39 = arith.constant 0 : i32
    %65 = arith.cmpi ne, %64, %c0_i32_39 : i32
    scf.if %65 {
      %c0_40 = arith.constant 0 : index
      %c0_41 = arith.constant 0 : index
      %66 = vector.load %arg12[%c0_40, %c0_41] : memref<1x128xf32, #tpu.memory_space<vmem>>, vector<1x128xf32>
      %c0_42 = arith.constant 0 : index
      %c0_43 = arith.constant 0 : index
      %67 = vector.load %arg15[%c0_42, %c0_43] : memref<128x128xf32, #tpu.memory_space<vmem>>, vector<128x128xf32>
      %cst_44 = arith.constant dense<0.000000e+00> : vector<1x128xf32>
      %68 = tpu.matmul %66, %67, %cst_44 {dimension_numbers = #tpu.dot_dimension_numbers<[1], [0], [0], [1], [0, 0, 1, 1], [], []>} : vector<1x128xf32>, vector<128x128xf32>, vector<1x128xf32> -> vector<1x128xf32>
      %c0_45 = arith.constant 0 : index
      %69 = memref.load %arg13[%c0_45] : memref<2xf32, #tpu.memory_space<smem>>
      %c0_46 = arith.constant 0 : index
      %c0_47 = arith.constant 0 : index
      %70 = vector.load %arg16[%c0_46, %c0_47] : memref<1x128xf32, #tpu.memory_space<vmem>>, vector<1x128xf32>
      %71 = vector.broadcast %69 : f32 to vector<1x128xf32>
      %72 = arith.mulf %71, %70 : vector<1x128xf32>
      %73 = arith.addf %68, %72 : vector<1x128xf32>
      %c1 = arith.constant 1 : index
      %74 = memref.load %arg13[%c1] : memref<2xf32, #tpu.memory_space<smem>>
      %75 = vector.broadcast %74 : f32 to vector<1x128xf32>
      %76 = arith.addf %73, %75 : vector<1x128xf32>
      %c0_48 = arith.constant 0 : index
      %c0_49 = arith.constant 0 : index
      %77 = vector.load %arg14[%c0_48, %c0_49] : memref<1x128xf32, #tpu.memory_space<vmem>>, vector<1x128xf32>
      tpu.vector_store %arg14[%c0_48, %c0_49], %76 {strides = array<i32>} : memref<1x128xf32, #tpu.memory_space<vmem>>, vector<1x128xf32>,
    } else {
    }
    return
  }
  func.func @transform_0(%arg0: i32) -> (i32, i32) {
    %c0_i32 = arith.constant 0 : i32
    %c0_i32_0 = arith.constant 0 : i32
    return %arg0, %c0_i32 : i32, i32
  }
  func.func @transform_1(%arg0: i32) -> (i32, i32) {
    %c0_i32 = arith.constant 0 : i32
    %c0_i32_0 = arith.constant 0 : i32
    return %arg0, %c0_i32 : i32, i32
  }
  func.func @transform_2(%arg0: i32) -> (i32, i32) {
    %c0_i32 = arith.constant 0 : i32
    %c0_i32_0 = arith.constant 0 : i32
    return %arg0, %c0_i32 : i32, i32
  }
  func.func @transform_3(%arg0: i32) -> (i32, i32) {
    %c0_i32 = arith.constant 0 : i32
    %c0_i32_0 = arith.constant 0 : i32
    %c0_i32_1 = arith.constant 0 : i32
    return %c0_i32, %c0_i32_0 : i32, i32
  }
  func.func @transform_4(%arg0: i32) -> (i32, i32) {
    %c0_i32 = arith.constant 0 : i32
    %c0_i32_0 = arith.constant 0 : i32
    %c0_i32_1 = arith.constant 0 : i32
    return %c0_i32, %c0_i32_0 : i32, i32
  }
  func.func @transform_5(%arg0: i32) -> (i32, i32) {
    %c0_i32 = arith.constant 0 : i32
    %c0_i32_0 = arith.constant 0 : i32
    %c0_i32_1 = arith.constant 0 : i32
    return %c0_i32, %c0_i32_0 : i32, i32
  }
  func.func @transform_6(%arg0: i32) -> (i32, i32) {
    %c0_i32 = arith.constant 0 : i32
    %c0_i32_0 = arith.constant 0 : i32
    %c0_i32_1 = arith.constant 0 : i32
    return %c0_i32, %c0_i32_0 : i32, i32
  }
  func.func @transform_7(%arg0: i32) -> (i32, i32) {
    %c0_i32 = arith.constant 0 : i32
    %c0_i32_0 = arith.constant 0 : i32
    %c0_i32_1 = arith.constant 0 : i32
    return %c0_i32, %c0_i32_0 : i32, i32
  }
  func.func @transform_8(%arg0: i32) -> (i32, i32) {
    %c0_i32 = arith.constant 0 : i32
    %c0_i32_0 = arith.constant 0 : i32
    %c0_i32_1 = arith.constant 0 : i32
    return %c0_i32, %c0_i32_0 : i32, i32
  }
  func.func @transform_9(%arg0: i32) -> (i32, i32) {
    %c0_i32 = arith.constant 0 : i32
    %c0_i32_0 = arith.constant 0 : i32
    %c0_i32_1 = arith.constant 0 : i32
    return %c0_i32, %c0_i32_0 : i32, i32
  }
  func.func @transform_10(%arg0: i32) -> (i32, i32) {
    %c0_i32 = arith.constant 0 : i32
    %c0_i32_0 = arith.constant 0 : i32
    %c0_i32_1 = arith.constant 0 : i32
    return %c0_i32, %c0_i32_0 : i32, i32
  }
  func.func @transform_11(%arg0: i32) -> (i32, i32) {
    %c0_i32 = arith.constant 0 : i32
    %c0_i32_0 = arith.constant 0 : i32
    %c0_i32_1 = arith.constant 0 : i32
    return %c0_i32, %c0_i32_0 : i32, i32
  }
  func.func @transform_12(%arg0: i32) -> i32 {
    %c0_i32 = arith.constant 0 : i32
    %c0_i32_0 = arith.constant 0 : i32
    return %c0_i32 : i32
  }
  func.func @transform_13(%arg0: i32) -> (i32, i32) {
    %c0_i32 = arith.constant 0 : i32
    %c0_i32_0 = arith.constant 0 : i32
    %c0_i32_1 = arith.constant 0 : i32
    return %c0_i32, %c0_i32_0 : i32, i32
  }
}

</mosaic_0001>

<llo_original>
// kernel: tpu_custom_call.1
$region0: #{tpu_custom_call.1}
  #allocation0 [shape = 'u32[]', space=smem, size = 0x4, offset = 0x4, fixed_abs, tag = 'smem constant byte address 0x4 - core index']
  #allocation1 [shape = 'u32[144,128]{1,0:T(1,128)}', space=vmem, size = 0x12000, scoped, tag = 'internal scratch']
  #allocation2 [shape = 'f32[128,128]{1,0:T(8,128)}', space=vmem, size = 0x10000, scoped, tag = 'scratch operand']
  #allocation3 [shape = 'f32[1,128]{1,0:T(1,128)}', space=vmem, size = 0x200, scoped, tag = 'scratch operand']
  %s0 = inlined_call_operand.vmem [shape: s32[24,1], index: 0, kind: input, shape index: {}]
  %s1 = inlined_call_operand.vmem [shape: s32[24,1], index: 1, kind: input, shape index: {}]
  %s2 = inlined_call_operand.vmem [shape: f32[24,3], index: 2, kind: input, shape index: {}]
  %s3 = inlined_call_operand.hbm [shape: f32[128,128], index: 3, kind: input, shape index: {}]
  %s4 = inlined_call_operand.hbm [shape: f32[128,128], index: 4, kind: input, shape index: {}]
  %s5 = inlined_call_operand.vmem [shape: f32[1,128], index: 5, kind: input, shape index: {}]
  %s6 = inlined_call_operand.hbm [shape: f32[128,128], index: 6, kind: input, shape index: {}]
  %s7 = inlined_call_operand.vmem [shape: f32[1,128], index: 7, kind: input, shape index: {}]
  %s8 = inlined_call_operand.hbm [shape: f32[128,128], index: 8, kind: input, shape index: {}]
  %s9 = inlined_call_operand.hbm [shape: f32[128,128], index: 9, kind: input, shape index: {}]
  %s10 = inlined_call_operand.vmem [shape: f32[1,128], index: 10, kind: input, shape index: {}]
  %s11 = inlined_call_operand.vmem [shape: f32[1,128], index: 11, kind: input, shape index: {}]
  %s12 = inlined_call_operand.vmem [shape: f32[2], index: 12, kind: input, shape index: {}]
  %s13 = inlined_call_operand.hbm [shape: f32[1,128], index: 13, kind: output, shape index: {}]
  %s14 = sld [smem:[#allocation0]]
  $region117: #{tpu_custom_call.1} parent=0
    _
  %s16 = ssub.s32 1, %s14
  %s17 = scalar_select 0, %s16, %s14
  $region1: #{tpu_custom_call.1} parent=0
    #allocation4 [shape = 'u8[65536]{0}', space=vmem, size = 0x10000, scoped, tag = 'input window, operand 3, single buffered']
    #allocation5 [shape = 's32[2]{0}', space=sflag, size = 0x8, scoped, tag = 'scoped memory for tpu_custom_call.1']
    #allocation6 [shape = 's32[2]{0}', space=sflag, size = 0x8, scoped, tag = 'scoped memory for tpu_custom_call.1']
    #allocation7 [shape = 's32[2]{0}', space=sflag, size = 0x8, scoped, tag = 'scoped memory for tpu_custom_call.1']
    #allocation8 [shape = 'u8[65536]{0}', space=vmem, size = 0x10000, scoped, tag = 'input window, operand 4, single buffered']
    #allocation9 [shape = 's32[1]{0}', space=sflag, size = 0x4, scoped, tag = 'scoped memory for tpu_custom_call.1']
    #allocation10 [shape = 'u8[65536]{0}', space=vmem, size = 0x10000, scoped, tag = 'input window, operand 6, single buffered']
    #allocation11 [shape = 'u8[65536]{0}', space=vmem, size = 0x10000, scoped, tag = 'input window, operand 8, single buffered']
    #allocation12 [shape = 's32[1]{0}', space=sflag, size = 0x4, scoped, tag = 'scoped memory for tpu_custom_call.1']
    #allocation13 [shape = 'u8[65536]{0}', space=vmem, size = 0x10000, scoped, tag = 'input window, operand 9, single buffered']
    #allocation14 [shape = 'u8[512]{0}', space=smem, size = 0x200, scoped, tag = 'input window, operand 12, single buffered']
    #allocation15 [shape = 'u8[512]{0}', space=vmem, size = 0x400, scoped, tag = 'output window, operand 0, single buffered']
    %18 = vsyncpa [#allocation5], 0
    %19 = vsyncpa [#allocation9], 0
    %20 = vsyncpa [#allocation12], 0
    %21 = vsyncpa [#allocation7], 0
    %22 = vsyncpa [#allocation6], 0
    loop: start=0, step=1, limit=5
    $region2: #{tpu_custom_call.1} parent=1 // loop_pre_header
      _
    $region3: #{tpu_custom_call.1} parent=1 // loop_header
      %s24 = sphi 0, %s28
      %p25 = scmp.ge.s32.totalorder %s24, 5
      %s34 = sphi 0, %s36
      %s37 = sphi 0, %s34
      %s38 = sphi 0, %s37
      %s54 = sphi 0, %s38
      %s60 = sphi 0, %s62
      %s63 = sphi 0, %s60
      %s64 = sphi 0, %s63
      %s80 = sphi 0, %s64
      %s86 = sphi 0, %s88
      %s89 = sphi 0, %s86
      %s90 = sphi 0, %s89
      %s106 = sphi 0, %s90
      %s110 = sphi 0, %s110
      %s112 = sphi 0, %s110
      %s113 = sphi 0, %s112
      %s127 = sphi 0, %s113
      %s131 = sphi 0, %s131
      %s133 = sphi 0, %s131
      %s134 = sphi 0, %s133
      %s148 = sphi 0, %s134
      %s152 = sphi 0, %s152
      %s154 = sphi 0, %s152
      %s155 = sphi 0, %s154
      %s169 = sphi 0, %s155
      %s173 = sphi 0, %s173
      %s175 = sphi 0, %s173
      %s176 = sphi 0, %s175
      %s190 = sphi 0, %s176
      %s194 = sphi 0, %s194
      %s196 = sphi 0, %s194
      %s197 = sphi 0, %s196
      %s211 = sphi 0, %s197
      %s215 = sphi 0, %s215
      %s217 = sphi 0, %s215
      %s218 = sphi 0, %s217
      %s232 = sphi 0, %s218
      %s236 = sphi 0, %s236
      %s238 = sphi 0, %s236
      %s239 = sphi 0, %s238
      %s253 = sphi 0, %s239
      %s257 = sphi 0, %s257
      %s259 = sphi 0, %s257
      %s260 = sphi 0, %s259
      %s274 = sphi 0, %s260
      %s278 = sphi 0, %s278
      %s280 = sphi 0, %s278
      %s281 = sphi 0, %s280
      %s295 = sphi 0, %s281
      %s299 = sphi 0, %s299
      %s301 = sphi 0, %s299
      %s302 = sphi 0, %s301
      %s316 = sphi 0, %s302
      %s320 = sphi 0, %s320
      %s322 = sphi 0, %s320
      %s323 = sphi 0, %s322
      %s337 = sphi 0, %s323
    $region4: #{tpu_custom_call.1} parent=1 // loop_header_branch
      %27 = sbr.rel (%p25) target = $region8
    $region5: #{tpu_custom_call.1} parent=1 // loop_body
      %s29 = ssub.s32 %s24, 1
      %s30 = ssub.s32 %s24, 2
      %s31 = sadd.s32 %s24, 1
      %s32 = ssub.s32 %s24, %s31
      %p33 = scmp.eq.s32.totalorder %s32, 0
      %s35 = sadd.s32 %s34, 1
      %s36 = scalar_select %p33, %s34, %s35
      %p39 = pneg %p33
      %p40 = scmp.eq.s32.totalorder %s24, 2
      %p41 = por %p39, %p40
      %p42 = scmp.ne.s32.totalorder %s34, %s37
      %p43 = scmp.eq.s32.totalorder %s24, 0
      %p44 = por %p42, %p43
      %p45 = scmp.ne.s32.totalorder %s34, %s37
      %p46 = scmp.eq.s32.totalorder %s29, 2
      %p47 = por %p45, %p46
      %p48 = scmp.ne.s32.totalorder %s37, %s38
      %p49 = scmp.eq.s32.totalorder %s29, 0
      %p50 = por %p48, %p49
      %p51 = scmp.ne.s32.totalorder %s37, %s38
      %p52 = scmp.eq.s32.totalorder %s30, 2
      %p53 = por %p51, %p52
      %p55 = scmp.ne.s32.totalorder %s38, %s54
      %p56 = scmp.eq.s32.totalorder %s30, 0
      %p57 = por %p55, %p56
      %s58 = ssub.s32 %s24, %s31
      %p59 = scmp.eq.s32.totalorder %s58, 0
      %s61 = sadd.s32 %s60, 1
      %s62 = scalar_select %p59, %s60, %s61
      %p65 = pneg %p59
      %p66 = scmp.eq.s32.totalorder %s24, 2
      %p67 = por %p65, %p66
      %p68 = scmp.ne.s32.totalorder %s60, %s63
      %p69 = scmp.eq.s32.totalorder %s24, 0
      %p70 = por %p68, %p69
      %p71 = scmp.ne.s32.totalorder %s60, %s63
      %p72 = scmp.eq.s32.totalorder %s29, 2
      %p73 = por %p71, %p72
      %p74 = scmp.ne.s32.totalorder %s63, %s64
      %p75 = scmp.eq.s32.totalorder %s29, 0
      %p76 = por %p74, %p75
      %p77 = scmp.ne.s32.totalorder %s63, %s64
      %p78 = scmp.eq.s32.totalorder %s30, 2
      %p79 = por %p77, %p78
      %p81 = scmp.ne.s32.totalorder %s64, %s80
      %p82 = scmp.eq.s32.totalorder %s30, 0
      %p83 = por %p81, %p82
      %s84 = ssub.s32 %s24, %s31
      %p85 = scmp.eq.s32.totalorder %s84, 0
      %s87 = sadd.s32 %s86, 1
      %s88 = scalar_select %p85, %s86, %s87
      %p91 = pneg %p85
      %p92 = scmp.eq.s32.totalorder %s24, 2
      %p93 = por %p91, %p92
      %p94 = scmp.ne.s32.totalorder %s86, %s89
      %p95 = scmp.eq.s32.totalorder %s24, 0
      %p96 = por %p94, %p95
      %p97 = scmp.ne.s32.totalorder %s86, %s89
      %p98 = scmp.eq.s32.totalorder %s29, 2
      %p99 = por %p97, %p98
      %p100 = scmp.ne.s32.totalorder %s89, %s90
      %p101 = scmp.eq.s32.totalorder %s29, 0
      %p102 = por %p100, %p101
      %p103 = scmp.ne.s32.totalorder %s89, %s90
      %p104 = scmp.eq.s32.totalorder %s30, 2
      %p105 = por %p103, %p104
      %p107 = scmp.ne.s32.totalorder %s90, %s106
      %p108 = scmp.eq.s32.totalorder %s30, 0
      %p109 = por %p107, %p108
      %s111 = sadd.s32 %s110, 1
      %p114 = scmp.eq.s32.totalorder %s24, 2
      %p115 = scmp.ne.s32.totalorder %s110, %s112
      %p116 = scmp.eq.s32.totalorder %s24, 0
      %p117 = por %p115, %p116
      %p118 = scmp.ne.s32.totalorder %s110, %s112
      %p119 = scmp.eq.s32.totalorder %s29, 2
      %p120 = por %p118, %p119
      %p121 = scmp.ne.s32.totalorder %s112, %s113
      %p122 = scmp.eq.s32.totalorder %s29, 0
      %p123 = por %p121, %p122
      %p124 = scmp.ne.s32.totalorder %s112, %s113
      %p125 = scmp.eq.s32.totalorder %s30, 2
      %p126 = por %p124, %p125
      %p128 = scmp.ne.s32.totalorder %s113, %s127
      %p129 = scmp.eq.s32.totalorder %s30, 0
      %p130 = por %p128, %p129
      %s132 = sadd.s32 %s131, 1
      %p135 = scmp.eq.s32.totalorder %s24, 2
      %p136 = scmp.ne.s32.totalorder %s131, %s133
      %p137 = scmp.eq.s32.totalorder %s24, 0
      %p138 = por %p136, %p137
      %p139 = scmp.ne.s32.totalorder %s131, %s133
      %p140 = scmp.eq.s32.totalorder %s29, 2
      %p141 = por %p139, %p140
      %p142 = scmp.ne.s32.totalorder %s133, %s134
      %p143 = scmp.eq.s32.totalorder %s29, 0
      %p144 = por %p142, %p143
      %p145 = scmp.ne.s32.totalorder %s133, %s134
      %p146 = scmp.eq.s32.totalorder %s30, 2
      %p147 = por %p145, %p146
      %p149 = scmp.ne.s32.totalorder %s134, %s148
      %p150 = scmp.eq.s32.totalorder %s30, 0
      %p151 = por %p149, %p150
      %s153 = sadd.s32 %s152, 1
      %p156 = scmp.eq.s32.totalorder %s24, 2
      %p157 = scmp.ne.s32.totalorder %s152, %s154
      %p158 = scmp.eq.s32.totalorder %s24, 0
      %p159 = por %p157, %p158
      %p160 = scmp.ne.s32.totalorder %s152, %s154
      %p161 = scmp.eq.s32.totalorder %s29, 2
      %p162 = por %p160, %p161
      %p163 = scmp.ne.s32.totalorder %s154, %s155
      %p164 = scmp.eq.s32.totalorder %s29, 0
      %p165 = por %p163, %p164
      %p166 = scmp.ne.s32.totalorder %s154, %s155
      %p167 = scmp.eq.s32.totalorder %s30, 2
      %p168 = por %p166, %p167
      %p170 = scmp.ne.s32.totalorder %s155, %s169
      %p171 = scmp.eq.s32.totalorder %s30, 0
      %p172 = por %p170, %p171
      %s174 = sadd.s32 %s173, 1
      %p177 = scmp.eq.s32.totalorder %s24, 2
      %p178 = scmp.ne.s32.totalorder %s173, %s175
      %p179 = scmp.eq.s32.totalorder %s24, 0
      %p180 = por %p178, %p179
      %p181 = scmp.ne.s32.totalorder %s173, %s175
      %p182 = scmp.eq.s32.totalorder %s29, 2
      %p183 = por %p181, %p182
      %p184 = scmp.ne.s32.totalorder %s175, %s176
      %p185 = scmp.eq.s32.totalorder %s29, 0
      %p186 = por %p184, %p185
      %p187 = scmp.ne.s32.totalorder %s175, %s176
      %p188 = scmp.eq.s32.totalorder %s30, 2
      %p189 = por %p187, %p188
      %p191 = scmp.ne.s32.totalorder %s176, %s190
      %p192 = scmp.eq.s32.totalorder %s30, 0
      %p193 = por %p191, %p192
      %s195 = sadd.s32 %s194, 1
      %p198 = scmp.eq.s32.totalorder %s24, 2
      %p199 = scmp.ne.s32.totalorder %s194, %s196
      %p200 = scmp.eq.s32.totalorder %s24, 0
      %p201 = por %p199, %p200
      %p202 = scmp.ne.s32.totalorder %s194, %s196
      %p203 = scmp.eq.s32.totalorder %s29, 2
      %p204 = por %p202, %p203
      %p205 = scmp.ne.s32.totalorder %s196, %s197
      %p206 = scmp.eq.s32.totalorder %s29, 0
      %p207 = por %p205, %p206
      %p208 = scmp.ne.s32.totalorder %s196, %s197
      %p209 = scmp.eq.s32.totalorder %s30, 2
      %p210 = por %p208, %p209
      %p212 = scmp.ne.s32.totalorder %s197, %s211
      %p213 = scmp.eq.s32.totalorder %s30, 0
      %p214 = por %p212, %p213
      %s216 = sadd.s32 %s215, 1
      %p219 = scmp.eq.s32.totalorder %s24, 2
      %p220 = scmp.ne.s32.totalorder %s215, %s217
      %p221 = scmp.eq.s32.totalorder %s24, 0
      %p222 = por %p220, %p221
      %p223 = scmp.ne.s32.totalorder %s215, %s217
      %p224 = scmp.eq.s32.totalorder %s29, 2
      %p225 = por %p223, %p224
      %p226 = scmp.ne.s32.totalorder %s217, %s218
      %p227 = scmp.eq.s32.totalorder %s29, 0
      %p228 = por %p226, %p227
      %p229 = scmp.ne.s32.totalorder %s217, %s218
      %p230 = scmp.eq.s32.totalorder %s30, 2
      %p231 = por %p229, %p230
      %p233 = scmp.ne.s32.totalorder %s218, %s232
      %p234 = scmp.eq.s32.totalorder %s30, 0
      %p235 = por %p233, %p234
      %s237 = sadd.s32 %s236, 1
      %p240 = scmp.eq.s32.totalorder %s24, 2
      %p241 = scmp.ne.s32.totalorder %s236, %s238
      %p242 = scmp.eq.s32.totalorder %s24, 0
      %p243 = por %p241, %p242
      %p244 = scmp.ne.s32.totalorder %s236, %s238
      %p245 = scmp.eq.s32.totalorder %s29, 2
      %p246 = por %p244, %p245
      %p247 = scmp.ne.s32.totalorder %s238, %s239
      %p248 = scmp.eq.s32.totalorder %s29, 0
      %p249 = por %p247, %p248
      %p250 = scmp.ne.s32.totalorder %s238, %s239
      %p251 = scmp.eq.s32.totalorder %s30, 2
      %p252 = por %p250, %p251
      %p254 = scmp.ne.s32.totalorder %s239, %s253
      %p255 = scmp.eq.s32.totalorder %s30, 0
      %p256 = por %p254, %p255
      %s258 = sadd.s32 %s257, 1
      %p261 = scmp.eq.s32.totalorder %s24, 2
      %p262 = scmp.ne.s32.totalorder %s257, %s259
      %p263 = scmp.eq.s32.totalorder %s24, 0
      %p264 = por %p262, %p263
      %p265 = scmp.ne.s32.totalorder %s257, %s259
      %p266 = scmp.eq.s32.totalorder %s29, 2
      %p267 = por %p265, %p266
      %p268 = scmp.ne.s32.totalorder %s259, %s260
      %p269 = scmp.eq.s32.totalorder %s29, 0
      %p270 = por %p268, %p269
      %p271 = scmp.ne.s32.totalorder %s259, %s260
      %p272 = scmp.eq.s32.totalorder %s30, 2
      %p273 = por %p271, %p272
      %p275 = scmp.ne.s32.totalorder %s260, %s274
      %p276 = scmp.eq.s32.totalorder %s30, 0
      %p277 = por %p275, %p276
      %s279 = sadd.s32 %s278, 1
      %p282 = scmp.eq.s32.totalorder %s24, 2
      %p283 = scmp.ne.s32.totalorder %s278, %s280
      %p284 = scmp.eq.s32.totalorder %s24, 0
      %p285 = por %p283, %p284
      %p286 = scmp.ne.s32.totalorder %s278, %s280
      %p287 = scmp.eq.s32.totalorder %s29, 2
      %p288 = por %p286, %p287
      %p289 = scmp.ne.s32.totalorder %s280, %s281
      %p290 = scmp.eq.s32.totalorder %s29, 0
      %p291 = por %p289, %p290
      %p292 = scmp.ne.s32.totalorder %s280, %s281
      %p293 = scmp.eq.s32.totalorder %s30, 2
      %p294 = por %p292, %p293
      %p296 = scmp.ne.s32.totalorder %s281, %s295
      %p297 = scmp.eq.s32.totalorder %s30, 0
      %p298 = por %p296, %p297
      %s300 = sadd.s32 %s299, 1
      %p303 = scmp.eq.s32.totalorder %s24, 2
      %p304 = scmp.ne.s32.totalorder %s299, %s301
      %p305 = scmp.eq.s32.totalorder %s24, 0
      %p306 = por %p304, %p305
      %p307 = scmp.ne.s32.totalorder %s299, %s301
      %p308 = scmp.eq.s32.totalorder %s29, 2
      %p309 = por %p307, %p308
      %p310 = scmp.ne.s32.totalorder %s301, %s302
      %p311 = scmp.eq.s32.totalorder %s29, 0
      %p312 = por %p310, %p311
      %p313 = scmp.ne.s32.totalorder %s301, %s302
      %p314 = scmp.eq.s32.totalorder %s30, 2
      %p315 = por %p313, %p314
      %p317 = scmp.ne.s32.totalorder %s302, %s316
      %p318 = scmp.eq.s32.totalorder %s30, 0
      %p319 = por %p317, %p318
      %s321 = sadd.s32 %s320, 1
      %p324 = scmp.eq.s32.totalorder %s24, 2
      %p325 = scmp.ne.s32.totalorder %s320, %s322
      %p326 = scmp.eq.s32.totalorder %s24, 0
      %p327 = por %p325, %p326
      %p328 = scmp.ne.s32.totalorder %s320, %s322
      %p329 = scmp.eq.s32.totalorder %s29, 2
      %p330 = por %p328, %p329
      %p331 = scmp.ne.s32.totalorder %s322, %s323
      %p332 = scmp.eq.s32.totalorder %s29, 0
      %p333 = por %p331, %p332
      %p334 = scmp.ne.s32.totalorder %s322, %s323
      %p335 = scmp.eq.s32.totalorder %s30, 2
      %p336 = por %p334, %p335
      %p338 = scmp.ne.s32.totalorder %s323, %s337
      %p339 = scmp.eq.s32.totalorder %s30, 0
      %p340 = por %p338, %p339
      %p341 = scmp.le.s32.totalorder 1, %s24
      %p342 = scmp.lt.s32.totalorder %s24, 4
      %p343 = pnand %p341, %p342
      %p344 = pneg %p343
      // Predicated region
      $region9: #{tpu_custom_call.1} parent=5 // pred_check
        _
      $region10: #{tpu_custom_call.1} parent=5 // pred_check_branch
        %346 = sbr.rel (%p343) target = $region12
      $region11: #{tpu_custom_call.1} parent=5 // pred_region
        %s347 = ssub.s32 %s24, 1
        // Predicated region
        $region13: #{tpu_custom_call.1} parent=11 // pred_check
          %p348 = pneg %p123
        $region14: #{tpu_custom_call.1} parent=11 // pred_check_branch
          %350 = sbr.rel (%p348) target = $region16
        $region15: #{tpu_custom_call.1} parent=11 // pred_region
          %s352 = ssub.s32 2048, 2048
          %353 = vsyncadd [#allocation5], %s352
          %s354 = sshll.u32 [#allocation4], 4
          %s355 = int_to_ptr.vmem [resolvable:$true] %s354
          %360 = dma.hbm_to_vmem [thread:$0]  %s3, 2048, %s355, [#allocation5], 128, 128, 8
        $region16: #{tpu_custom_call.1} parent=11 // pred_fallthru
          _
        // Predicated region
        $region17: #{tpu_custom_call.1} parent=11 // pred_check
          %p361 = pneg %p144
        $region18: #{tpu_custom_call.1} parent=11 // pred_check_branch
          %363 = sbr.rel (%p361) target = $region20
        $region19: #{tpu_custom_call.1} parent=11 // pred_region
          %s365 = ssub.s32 2048, 2048
          %366 = vsyncadd [#allocation9], %s365
          %s367 = sshll.u32 [#allocation8], 4
          %s368 = int_to_ptr.vmem [resolvable:$true] %s367
          %373 = dma.hbm_to_vmem [thread:$0]  %s4, 2048, %s368, [#allocation9], 128, 128, 8
        $region20: #{tpu_custom_call.1} parent=11 // pred_fallthru
          _
        // Predicated region
        $region21: #{tpu_custom_call.1} parent=11 // pred_check
          %p374 = pneg %p165
        $region22: #{tpu_custom_call.1} parent=11 // pred_check_branch
          %376 = sbr.rel (%p374) target = $region24
        $region23: #{tpu_custom_call.1} parent=11 // pred_region
          _
        $region24: #{tpu_custom_call.1} parent=11 // pred_fallthru
          _
        // Predicated region
        $region25: #{tpu_custom_call.1} parent=11 // pred_check
          %p377 = pneg %p186
        $region26: #{tpu_custom_call.1} parent=11 // pred_check_branch
          %379 = sbr.rel (%p377) target = $region28
        $region27: #{tpu_custom_call.1} parent=11 // pred_region
          %s381 = ssub.s32 2048, 2048
          %382 = vsyncadd [#allocation9], %s381
          %s383 = sshll.u32 [#allocation10], 4
          %s384 = int_to_ptr.vmem [resolvable:$true] %s383
          %389 = dma.hbm_to_vmem [thread:$0]  %s6, 2048, %s384, [#allocation9], 128, 128, 8
        $region28: #{tpu_custom_call.1} parent=11 // pred_fallthru
          _
        // Predicated region
        $region29: #{tpu_custom_call.1} parent=11 // pred_check
          %p390 = pneg %p207
        $region30: #{tpu_custom_call.1} parent=11 // pred_check_branch
          %392 = sbr.rel (%p390) target = $region32
        $region31: #{tpu_custom_call.1} parent=11 // pred_region
          _
        $region32: #{tpu_custom_call.1} parent=11 // pred_fallthru
          _
        // Predicated region
        $region33: #{tpu_custom_call.1} parent=11 // pred_check
          %p393 = pneg %p228
        $region34: #{tpu_custom_call.1} parent=11 // pred_check_branch
          %395 = sbr.rel (%p393) target = $region36
        $region35: #{tpu_custom_call.1} parent=11 // pred_region
          %s397 = ssub.s32 2048, 2048
          %398 = vsyncadd [#allocation12], %s397
          %s399 = sshll.u32 [#allocation11], 4
          %s400 = int_to_ptr.vmem [resolvable:$true] %s399
          %405 = dma.hbm_to_vmem [thread:$0]  %s8, 2048, %s400, [#allocation12], 128, 128, 8
        $region36: #{tpu_custom_call.1} parent=11 // pred_fallthru
          _
        // Predicated region
        $region37: #{tpu_custom_call.1} parent=11 // pred_check
          %p406 = pneg %p249
        $region38: #{tpu_custom_call.1} parent=11 // pred_check_branch
          %408 = sbr.rel (%p406) target = $region40
        $region39: #{tpu_custom_call.1} parent=11 // pred_region
          %s410 = ssub.s32 2048, 2048
          %411 = vsyncadd [#allocation12], %s410
          %s412 = sshll.u32 [#allocation13], 4
          %s413 = int_to_ptr.vmem [resolvable:$true] %s412
          %418 = dma.hbm_to_vmem [thread:$0]  %s9, 2048, %s413, [#allocation12], 128, 128, 8
        $region40: #{tpu_custom_call.1} parent=11 // pred_fallthru
          _
        // Predicated region
        $region41: #{tpu_custom_call.1} parent=11 // pred_check
          %p419 = pneg %p270
        $region42: #{tpu_custom_call.1} parent=11 // pred_check_branch
          %421 = sbr.rel (%p419) target = $region44
        $region43: #{tpu_custom_call.1} parent=11 // pred_region
          _
        $region44: #{tpu_custom_call.1} parent=11 // pred_fallthru
          _
        // Predicated region
        $region45: #{tpu_custom_call.1} parent=11 // pred_check
          %p422 = pneg %p291
        $region46: #{tpu_custom_call.1} parent=11 // pred_check_branch
          %424 = sbr.rel (%p422) target = $region48
        $region47: #{tpu_custom_call.1} parent=11 // pred_region
          _
        $region48: #{tpu_custom_call.1} parent=11 // pred_fallthru
          _
        // Predicated region
        $region49: #{tpu_custom_call.1} parent=11 // pred_check
          %p425 = pneg %p312
        $region50: #{tpu_custom_call.1} parent=11 // pred_check_branch
          %427 = sbr.rel (%p425) target = $region52
        $region51: #{tpu_custom_call.1} parent=11 // pred_region
          %s429 = ssub.s32 16, 16
          %430 = vsyncadd [#allocation7], %s429
          %s432 = sshll.u32 %s12, 4
          %s433 = int_to_ptr.vmem [resolvable:$true] %s432
          %435 = dma.vmem_to_smem %s433, 16, [#allocation14], [#allocation7]
        $region52: #{tpu_custom_call.1} parent=11 // pred_fallthru
          _
      $region12: #{tpu_custom_call.1} parent=5 // pred_fallthru
        _
      %p436 = scmp.lt.s32.totalorder %s24, 3
      // Predicated region
      $region53: #{tpu_custom_call.1} parent=5 // pred_check
        %p437 = pneg %p436
      $region54: #{tpu_custom_call.1} parent=5 // pred_check_branch
        %439 = sbr.rel (%p437) target = $region56
      $region55: #{tpu_custom_call.1} parent=5 // pred_region
        // Predicated region
        $region57: #{tpu_custom_call.1} parent=55 // pred_check
          %p440 = pneg %p44
        $region58: #{tpu_custom_call.1} parent=55 // pred_check_branch
          %442 = sbr.rel (%p440) target = $region60
        $region59: #{tpu_custom_call.1} parent=55 // pred_region
          %p443 = scmp.lt.s32.totalorder %s24, 2
          %s444 = scalar_select %p443, %s24, 2
          %s445 = smul.addr %s444, 8
          %s446 = scalar_lea.vmem %s0, %s445
        $region60: #{tpu_custom_call.1} parent=55 // pred_fallthru
          _
        // Predicated region
        $region61: #{tpu_custom_call.1} parent=55 // pred_check
          %p447 = pneg %p70
        $region62: #{tpu_custom_call.1} parent=55 // pred_check_branch
          %449 = sbr.rel (%p447) target = $region64
        $region63: #{tpu_custom_call.1} parent=55 // pred_region
          %p450 = scmp.lt.s32.totalorder %s24, 2
          %s451 = scalar_select %p450, %s24, 2
          %s452 = smul.addr %s451, 8
          %s453 = scalar_lea.vmem %s1, %s452
        $region64: #{tpu_custom_call.1} parent=55 // pred_fallthru
          _
        // Predicated region
        $region65: #{tpu_custom_call.1} parent=55 // pred_check
          %p454 = pneg %p96
        $region66: #{tpu_custom_call.1} parent=55 // pred_check_branch
          %456 = sbr.rel (%p454) target = $region68
        $region67: #{tpu_custom_call.1} parent=55 // pred_region
          %p457 = scmp.lt.s32.totalorder %s24, 2
          %s458 = scalar_select %p457, %s24, 2
          %s459 = smul.addr %s458, 8
          %s460 = scalar_lea.vmem %s2, %s459
        $region68: #{tpu_custom_call.1} parent=55 // pred_fallthru
          _
      $region56: #{tpu_custom_call.1} parent=5 // pred_fallthru
        _
      %p461 = scmp.le.s32.totalorder 1, %s24
      %p462 = scmp.lt.s32.totalorder %s24, 4
      %p463 = pnand %p461, %p462
      %p464 = pneg %p463
      // Predicated region
      $region69: #{tpu_custom_call.1} parent=5 // pred_check
        _
      $region70: #{tpu_custom_call.1} parent=5 // pred_check_branch
        %466 = sbr.rel (%p463) target = $region72
      $region71: #{tpu_custom_call.1} parent=5 // pred_region
        %s467 = ssub.s32 %s24, 1
        // Predicated region
        $region73: #{tpu_custom_call.1} parent=71 // pred_check
          %p468 = pneg %p123
        $region74: #{tpu_custom_call.1} parent=71 // pred_check_branch
          %470 = sbr.rel (%p468) target = $region76
        $region75: #{tpu_custom_call.1} parent=71 // pred_region
          %471 = dma.done [#allocation5], 2048
        $region76: #{tpu_custom_call.1} parent=71 // pred_fallthru
          _
        // Predicated region
        $region77: #{tpu_custom_call.1} parent=71 // pred_check
          %p472 = pneg %p144
        $region78: #{tpu_custom_call.1} parent=71 // pred_check_branch
          %474 = sbr.rel (%p472) target = $region80
        $region79: #{tpu_custom_call.1} parent=71 // pred_region
          %475 = dma.done [#allocation9], 2048
        $region80: #{tpu_custom_call.1} parent=71 // pred_fallthru
          _
        // Predicated region
        $region81: #{tpu_custom_call.1} parent=71 // pred_check
          %p476 = pneg %p186
        $region82: #{tpu_custom_call.1} parent=71 // pred_check_branch
          %478 = sbr.rel (%p476) target = $region84
        $region83: #{tpu_custom_call.1} parent=71 // pred_region
          %479 = dma.done [#allocation9], 2048
        $region84: #{tpu_custom_call.1} parent=71 // pred_fallthru
          _
        // Predicated region
        $region85: #{tpu_custom_call.1} parent=71 // pred_check
          %p480 = pneg %p228
        $region86: #{tpu_custom_call.1} parent=71 // pred_check_branch
          %482 = sbr.rel (%p480) target = $region88
        $region87: #{tpu_custom_call.1} parent=71 // pred_region
          %483 = dma.done [#allocation12], 2048
        $region88: #{tpu_custom_call.1} parent=71 // pred_fallthru
          _
        // Predicated region
        $region89: #{tpu_custom_call.1} parent=71 // pred_check
          %p484 = pneg %p249
        $region90: #{tpu_custom_call.1} parent=71 // pred_check_branch
          %486 = sbr.rel (%p484) target = $region92
        $region91: #{tpu_custom_call.1} parent=71 // pred_region
          %487 = dma.done [#allocation12], 2048
        $region92: #{tpu_custom_call.1} parent=71 // pred_fallthru
          _
        // Predicated region
        $region93: #{tpu_custom_call.1} parent=71 // pred_check
          %p488 = pneg %p312
        $region94: #{tpu_custom_call.1} parent=71 // pred_check_branch
          %490 = sbr.rel (%p488) target = $region96
        $region95: #{tpu_custom_call.1} parent=71 // pred_region
          %491 = dma.done [#allocation7], 16
        $region96: #{tpu_custom_call.1} parent=71 // pred_fallthru
          _
        %492 = sfence
        %p493 = scmp.lt.s32.totalorder %s29, 2
        %s494 = scalar_select %p493, %s29, 2
        %s495 = smul.addr %s494, 8
        %s496 = scalar_lea.vmem %s0, %s495
        %p497 = pneg %p50
        %p498 = pneg %p47
        %p499 = scmp.lt.s32.totalorder %s29, 2
        %s500 = scalar_select %p499, %s29, 2
        %s501 = smul.addr %s500, 8
        %s502 = scalar_lea.vmem %s1, %s501
        %p503 = pneg %p76
        %p504 = pneg %p73
        %p505 = scmp.lt.s32.totalorder %s29, 2
        %s506 = scalar_select %p505, %s29, 2
        %s507 = smul.addr %s506, 8
        %s508 = scalar_lea.vmem %s2, %s507
        %p509 = pneg %p102
        %p510 = pneg %p99
        %p511 = pneg %p123
        %p512 = pneg %p120
        %p513 = pneg %p144
        %p514 = pneg %p141
        %p515 = pneg %p165
        %p516 = pneg %p162
        %p517 = pneg %p186
        %p518 = pneg %p183
        %p519 = pneg %p207
        %p520 = pneg %p204
        %p521 = pneg %p228
        %p522 = pneg %p225
        %p523 = pneg %p249
        %p524 = pneg %p246
        %p525 = pneg %p270
        %p526 = pneg %p267
        %p527 = pneg %p291
        %p528 = pneg %p288
        %p529 = pneg %p312
        %p530 = pneg %p309
        %p531 = pneg %p333
        %p532 = pneg %p330
        %p533 = scmp.lt.s32.totalorder %s29, 2
        %s534 = scalar_select %p533, %s29, 2
        %s535 = smul.addr %s534, 8
        %s536 = scalar_lea.vmem %s0, %s535
        %p537 = scmp.lt.s32.totalorder %s29, 2
        %s538 = scalar_select %p537, %s29, 2
        %s539 = smul.addr %s538, 8
        %s540 = scalar_lea.vmem %s1, %s539
        %p541 = scmp.lt.s32.totalorder %s29, 2
        %s542 = scalar_select %p541, %s29, 2
        %s543 = smul.addr %s542, 8
        %s544 = scalar_lea.vmem %s2, %s543
        %p545 = scmp.eq.s32.totalorder %s29, 0
        // Predicated region
        $region97: #{tpu_custom_call.1} parent=71 // pred_check
          %p546 = pneg %p545
        $region98: #{tpu_custom_call.1} parent=71 // pred_check_branch
          %548 = sbr.rel (%p546) target = $region100
        $region99: #{tpu_custom_call.1} parent=71 // pred_region
          %549 = vst [vmem:[#allocation2] sm:$0xff] 0.0
          %550 = vst [vmem:[#allocation2 + $0x8] sm:$0xff] 0.0
          %551 = vst [vmem:[#allocation2 + $0x10] sm:$0xff] 0.0
          %552 = vst [vmem:[#allocation2 + $0x18] sm:$0xff] 0.0
          %553 = vst [vmem:[#allocation2 + $0x20] sm:$0xff] 0.0
          %554 = vst [vmem:[#allocation2 + $0x28] sm:$0xff] 0.0
          %555 = vst [vmem:[#allocation2 + $0x30] sm:$0xff] 0.0
          %556 = vst [vmem:[#allocation2 + $0x38] sm:$0xff] 0.0
          %557 = vst [vmem:[#allocation2 + $0x40] sm:$0xff] 0.0
          %558 = vst [vmem:[#allocation2 + $0x48] sm:$0xff] 0.0
          %559 = vst [vmem:[#allocation2 + $0x50] sm:$0xff] 0.0
          %560 = vst [vmem:[#allocation2 + $0x58] sm:$0xff] 0.0
          %561 = vst [vmem:[#allocation2 + $0x60] sm:$0xff] 0.0
          %562 = vst [vmem:[#allocation2 + $0x68] sm:$0xff] 0.0
          %563 = vst [vmem:[#allocation2 + $0x70] sm:$0xff] 0.0
          %564 = vst [vmem:[#allocation2 + $0x78] sm:$0xff] 0.0
          %565 = vst [vmem:[#allocation3] sm:$0x1] 0.0
        $region100: #{tpu_custom_call.1} parent=71 // pred_fallthru
          _
        %v566 = vld [vmem:[%s536] sm:$0xff]
        %v567 = vlaneseq
        %v568 = vand.u32 %v567, 127
        %569 = vset.pattern.permute.xlu0 0
        %570 = vperm.xlu0 %569, %v566
        %v571 = vpop.permute.xlu0 %570
        %vm572 = vcmp.eq.s32.totalorder %v571, %v568
        %v573 = vsel %vm572, 1, 0
        %v574 = vcvt.s32.f32 %v573
        %v575 = vld [vmem:[#allocation4] sm:$0xff]
        %v576 = vld [vmem:[#allocation4 + $0x8] sm:$0xff]
        %v577 = vld [vmem:[#allocation4 + $0x10] sm:$0xff]
        %v578 = vld [vmem:[#allocation4 + $0x18] sm:$0xff]
        %v579 = vld [vmem:[#allocation4 + $0x20] sm:$0xff]
        %v580 = vld [vmem:[#allocation4 + $0x28] sm:$0xff]
        %v581 = vld [vmem:[#allocation4 + $0x30] sm:$0xff]
        %v582 = vld [vmem:[#allocation4 + $0x38] sm:$0xff]
        %v583 = vld [vmem:[#allocation4 + $0x40] sm:$0xff]
        %v584 = vld [vmem:[#allocation4 + $0x48] sm:$0xff]
        %v585 = vld [vmem:[#allocation4 + $0x50] sm:$0xff]
        %v586 = vld [vmem:[#allocation4 + $0x58] sm:$0xff]
        %v587 = vld [vmem:[#allocation4 + $0x60] sm:$0xff]
        %v588 = vld [vmem:[#allocation4 + $0x68] sm:$0xff]
        %v589 = vld [vmem:[#allocation4 + $0x70] sm:$0xff]
        %v590 = vld [vmem:[#allocation4 + $0x78] sm:$0xff]
        %591 = vmatprep.subr.mxu0 0.0
        %592 = vmatpush1.msra.mxu0 %v575
        %593 = vmatprep.subr.mxu0 0.0
        %594 = vmatpush1.msra.mxu0 %v576
        %595 = vmatprep.subr.mxu0 0.0
        %596 = vmatpush1.msra.mxu0 %v577
        %597 = vmatprep.subr.mxu0 0.0
        %598 = vmatpush1.msra.mxu0 %v578
        %599 = vmatprep.subr.mxu0 0.0
        %600 = vmatpush1.msra.mxu0 %v579
        %601 = vmatprep.subr.mxu0 0.0
        %602 = vmatpush1.msra.mxu0 %v580
        %603 = vmatprep.subr.mxu0 0.0
        %604 = vmatpush1.msra.mxu0 %v581
        %605 = vmatprep.subr.mxu0 0.0
        %606 = vmatpush1.msra.mxu0 %v582
        %607 = vmatprep.subr.mxu0 0.0
        %608 = vmatpush1.msra.mxu0 %v583
        %609 = vmatprep.subr.mxu0 0.0
        %610 = vmatpush1.msra.mxu0 %v584
        %611 = vmatprep.subr.mxu0 0.0
        %612 = vmatpush1.msra.mxu0 %v585
        %613 = vmatprep.subr.mxu0 0.0
        %614 = vmatpush1.msra.mxu0 %v586
        %615 = vmatprep.subr.mxu0 0.0
        %616 = vmatpush1.msra.mxu0 %v587
        %617 = vmatprep.subr.mxu0 0.0
        %618 = vmatpush1.msra.mxu0 %v588
        %619 = vmatprep.subr.mxu0 0.0
        %620 = vmatpush1.msra.mxu0 %v589
        %621 = vmatprep.subr.mxu0 0.0
        %622 = vmatpush1.msra.mxu0 %v590
        %623 = vmatprep.subr.mxu0 0.0
        %624 = vmatpush1.msra.mxu0 0.0
        %625 = vmatprep.subr.mxu0 0.0
        %626 = vmatpush1.msra.mxu0 0.0
        %627 = vmatprep.subr.mxu0 0.0
        %628 = vmatpush1.msra.mxu0 0.0
        %629 = vmatprep.subr.mxu0 0.0
        %630 = vmatpush1.msra.mxu0 0.0
        %631 = vmatprep.subr.mxu0 0.0
        %632 = vmatpush1.msra.mxu0 0.0
        %633 = vmatprep.subr.mxu0 0.0
        %634 = vmatpush1.msra.mxu0 0.0
        %635 = vmatprep.subr.mxu0 0.0
        %636 = vmatpush1.msra.mxu0 0.0
        %637 = vmatprep.subr.mxu0 0.0
        %638 = vmatpush1.msra.mxu0 0.0
        %639 = vmatprep.subr.mxu0 0.0
        %640 = vmatpush1.msra.mxu0 0.0
        %641 = vmatprep.subr.mxu0 0.0
        %642 = vmatpush1.msra.mxu0 0.0
        %643 = vmatprep.subr.mxu0 0.0
        %644 = vmatpush1.msra.mxu0 0.0
        %645 = vmatprep.subr.mxu0 0.0
        %646 = vmatpush1.msra.mxu0 0.0
        %647 = vmatprep.subr.mxu0 0.0
        %648 = vmatpush1.msra.mxu0 0.0
        %649 = vmatprep.subr.mxu0 0.0
        %650 = vmatpush1.msra.mxu0 0.0
        %651 = vmatprep.subr.mxu0 0.0
        %652 = vmatpush1.msra.mxu0 0.0
        %653 = vmatprep.subr.mxu0 0.0
        %654 = vmatpush1.msra.mxu0 0.0
        %655 = vmatprep.mubr.f32.mxu0 0.0
        %656 = vmatmul.mubr.f32.gmra.mrb[0].mxu0 %v574
        %v657 = vpop.f32.mrb[0].mxu0
        %v658 = vadd.f32 0.0, %v657
        %v659 = vpop.f32.mrb[0].mxu0
        %660 = vdwg.mxu0
        %v661 = vld [vmem:[#allocation8] sm:$0xff]
        %v662 = vld [vmem:[#allocation8 + $0x8] sm:$0xff]
        %v663 = vld [vmem:[#allocation8 + $0x10] sm:$0xff]
        %v664 = vld [vmem:[#allocation8 + $0x18] sm:$0xff]
        %v665 = vld [vmem:[#allocation8 + $0x20] sm:$0xff]
        %v666 = vld [vmem:[#allocation8 + $0x28] sm:$0xff]
        %v667 = vld [vmem:[#allocation8 + $0x30] sm:$0xff]
        %v668 = vld [vmem:[#allocation8 + $0x38] sm:$0xff]
        %v669 = vld [vmem:[#allocation8 + $0x40] sm:$0xff]
        %v670 = vld [vmem:[#allocation8 + $0x48] sm:$0xff]
        %v671 = vld [vmem:[#allocation8 + $0x50] sm:$0xff]
        %v672 = vld [vmem:[#allocation8 + $0x58] sm:$0xff]
        %v673 = vld [vmem:[#allocation8 + $0x60] sm:$0xff]
        %v674 = vld [vmem:[#allocation8 + $0x68] sm:$0xff]
        %v675 = vld [vmem:[#allocation8 + $0x70] sm:$0xff]
        %v676 = vld [vmem:[#allocation8 + $0x78] sm:$0xff]
        %v677 = vld [vmem:[%s5] sm:$0x1]
        %v679 = vlaneseq
        %v680 = vshrl.u32 %v679, 7
        %v681 = vsub.s32 0, %v680
        %v682 = vrot.slane %v677, %v681
        %684 = vmatprep.subr.mxu0 0.0
        %685 = vmatpush1.msra.mxu0 %v661
        %686 = vmatprep.subr.mxu0 0.0
        %687 = vmatpush1.msra.mxu0 %v662
        %688 = vmatprep.subr.mxu0 0.0
        %689 = vmatpush1.msra.mxu0 %v663
        %690 = vmatprep.subr.mxu0 0.0
        %691 = vmatpush1.msra.mxu0 %v664
        %692 = vmatprep.subr.mxu0 0.0
        %693 = vmatpush1.msra.mxu0 %v665
        %694 = vmatprep.subr.mxu0 0.0
        %695 = vmatpush1.msra.mxu0 %v666
        %696 = vmatprep.subr.mxu0 0.0
        %697 = vmatpush1.msra.mxu0 %v667
        %698 = vmatprep.subr.mxu0 0.0
        %699 = vmatpush1.msra.mxu0 %v668
        %700 = vmatprep.subr.mxu0 0.0
        %701 = vmatpush1.msra.mxu0 %v669
        %702 = vmatprep.subr.mxu0 0.0
        %703 = vmatpush1.msra.mxu0 %v670
        %704 = vmatprep.subr.mxu0 0.0
        %705 = vmatpush1.msra.mxu0 %v671
        %706 = vmatprep.subr.mxu0 0.0
        %707 = vmatpush1.msra.mxu0 %v672
        %708 = vmatprep.subr.mxu0 0.0
        %709 = vmatpush1.msra.mxu0 %v673
        %710 = vmatprep.subr.mxu0 0.0
        %711 = vmatpush1.msra.mxu0 %v674
        %712 = vmatprep.subr.mxu0 0.0
        %713 = vmatpush1.msra.mxu0 %v675
        %714 = vmatprep.subr.mxu0 0.0
        %715 = vmatpush1.msra.mxu0 %v676
        %716 = vmatprep.subr.mxu0 0.0
        %717 = vmatpush1.msra.mxu0 0.0
        %718 = vmatprep.subr.mxu0 0.0
        %719 = vmatpush1.msra.mxu0 0.0
        %720 = vmatprep.subr.mxu0 0.0
        %721 = vmatpush1.msra.mxu0 0.0
        %722 = vmatprep.subr.mxu0 0.0
        %723 = vmatpush1.msra.mxu0 0.0
        %724 = vmatprep.subr.mxu0 0.0
        %725 = vmatpush1.msra.mxu0 0.0
        %726 = vmatprep.subr.mxu0 0.0
        %727 = vmatpush1.msra.mxu0 0.0
        %728 = vmatprep.subr.mxu0 0.0
        %729 = vmatpush1.msra.mxu0 0.0
        %730 = vmatprep.subr.mxu0 0.0
        %731 = vmatpush1.msra.mxu0 0.0
        %732 = vmatprep.subr.mxu0 0.0
        %733 = vmatpush1.msra.mxu0 0.0
        %734 = vmatprep.subr.mxu0 0.0
        %735 = vmatpush1.msra.mxu0 0.0
        %736 = vmatprep.subr.mxu0 0.0
        %737 = vmatpush1.msra.mxu0 0.0
        %738 = vmatprep.subr.mxu0 0.0
        %739 = vmatpush1.msra.mxu0 0.0
        %740 = vmatprep.subr.mxu0 0.0
        %741 = vmatpush1.msra.mxu0 0.0
        %742 = vmatprep.subr.mxu0 0.0
        %743 = vmatpush1.msra.mxu0 0.0
        %744 = vmatprep.subr.mxu0 0.0
        %745 = vmatpush1.msra.mxu0 0.0
        %746 = vmatprep.subr.mxu0 0.0
        %747 = vmatpush1.msra.mxu0 0.0
        %748 = vmatprep.mubr.f32.mxu0 0.0
        %749 = vmatmul.mubr.f32.gmra.mrb[0].mxu0 %v658
        %v750 = vpop.f32.mrb[0].mxu0
        %v751 = vadd.f32 %v682, %v750
        %v752 = vpop.f32.mrb[0].mxu0
        %753 = vdwg.mxu0
        %v754 = vxor.u32 %v751, 2147483648
        %v755 = vmul.f32 %v754, 1.442695
        %v756 = vpow.pop %v755
        %v757 = vadd.f32 %v756, 1.0
        %v758 = vrcp.pop %v757
        %v759 = vmul.f32 1.0, %v758
        %v760 = vmul.f32 %v751, %v759
        %v761 = vld [vmem:[#allocation10] sm:$0xff]
        %v762 = vld [vmem:[#allocation10 + $0x8] sm:$0xff]
        %v763 = vld [vmem:[#allocation10 + $0x10] sm:$0xff]
        %v764 = vld [vmem:[#allocation10 + $0x18] sm:$0xff]
        %v765 = vld [vmem:[#allocation10 + $0x20] sm:$0xff]
        %v766 = vld [vmem:[#allocation10 + $0x28] sm:$0xff]
        %v767 = vld [vmem:[#allocation10 + $0x30] sm:$0xff]
        %v768 = vld [vmem:[#allocation10 + $0x38] sm:$0xff]
        %v769 = vld [vmem:[#allocation10 + $0x40] sm:$0xff]
        %v770 = vld [vmem:[#allocation10 + $0x48] sm:$0xff]
        %v771 = vld [vmem:[#allocation10 + $0x50] sm:$0xff]
        %v772 = vld [vmem:[#allocation10 + $0x58] sm:$0xff]
        %v773 = vld [vmem:[#allocation10 + $0x60] sm:$0xff]
        %v774 = vld [vmem:[#allocation10 + $0x68] sm:$0xff]
        %v775 = vld [vmem:[#allocation10 + $0x70] sm:$0xff]
        %v776 = vld [vmem:[#allocation10 + $0x78] sm:$0xff]
        %v777 = vld [vmem:[%s7] sm:$0x1]
        %v779 = vlaneseq
        %v780 = vshrl.u32 %v779, 7
        %v781 = vsub.s32 0, %v780
        %v782 = vrot.slane %v777, %v781
        %784 = vmatprep.subr.mxu0 0.0
        %785 = vmatpush1.msra.mxu0 %v761
        %786 = vmatprep.subr.mxu0 0.0
        %787 = vmatpush1.msra.mxu0 %v762
        %788 = vmatprep.subr.mxu0 0.0
        %789 = vmatpush1.msra.mxu0 %v763
        %790 = vmatprep.subr.mxu0 0.0
        %791 = vmatpush1.msra.mxu0 %v764
        %792 = vmatprep.subr.mxu0 0.0
        %793 = vmatpush1.msra.mxu0 %v765
        %794 = vmatprep.subr.mxu0 0.0
        %795 = vmatpush1.msra.mxu0 %v766
        %796 = vmatprep.subr.mxu0 0.0
        %797 = vmatpush1.msra.mxu0 %v767
        %798 = vmatprep.subr.mxu0 0.0
        %799 = vmatpush1.msra.mxu0 %v768
        %800 = vmatprep.subr.mxu0 0.0
        %801 = vmatpush1.msra.mxu0 %v769
        %802 = vmatprep.subr.mxu0 0.0
        %803 = vmatpush1.msra.mxu0 %v770
        %804 = vmatprep.subr.mxu0 0.0
        %805 = vmatpush1.msra.mxu0 %v771
        %806 = vmatprep.subr.mxu0 0.0
        %807 = vmatpush1.msra.mxu0 %v772
        %808 = vmatprep.subr.mxu0 0.0
        %809 = vmatpush1.msra.mxu0 %v773
        %810 = vmatprep.subr.mxu0 0.0
        %811 = vmatpush1.msra.mxu0 %v774
        %812 = vmatprep.subr.mxu0 0.0
        %813 = vmatpush1.msra.mxu0 %v775
        %814 = vmatprep.subr.mxu0 0.0
        %815 = vmatpush1.msra.mxu0 %v776
        %816 = vmatprep.subr.mxu0 0.0
        %817 = vmatpush1.msra.mxu0 0.0
        %818 = vmatprep.subr.mxu0 0.0
        %819 = vmatpush1.msra.mxu0 0.0
        %820 = vmatprep.subr.mxu0 0.0
        %821 = vmatpush1.msra.mxu0 0.0
        %822 = vmatprep.subr.mxu0 0.0
        %823 = vmatpush1.msra.mxu0 0.0
        %824 = vmatprep.subr.mxu0 0.0
        %825 = vmatpush1.msra.mxu0 0.0
        %826 = vmatprep.subr.mxu0 0.0
        %827 = vmatpush1.msra.mxu0 0.0
        %828 = vmatprep.subr.mxu0 0.0
        %829 = vmatpush1.msra.mxu0 0.0
        %830 = vmatprep.subr.mxu0 0.0
        %831 = vmatpush1.msra.mxu0 0.0
        %832 = vmatprep.subr.mxu0 0.0
        %833 = vmatpush1.msra.mxu0 0.0
        %834 = vmatprep.subr.mxu0 0.0
        %835 = vmatpush1.msra.mxu0 0.0
        %836 = vmatprep.subr.mxu0 0.0
        %837 = vmatpush1.msra.mxu0 0.0
        %838 = vmatprep.subr.mxu0 0.0
        %839 = vmatpush1.msra.mxu0 0.0
        %840 = vmatprep.subr.mxu0 0.0
        %841 = vmatpush1.msra.mxu0 0.0
        %842 = vmatprep.subr.mxu0 0.0
        %843 = vmatpush1.msra.mxu0 0.0
        %844 = vmatprep.subr.mxu0 0.0
        %845 = vmatpush1.msra.mxu0 0.0
        %846 = vmatprep.subr.mxu0 0.0
        %847 = vmatpush1.msra.mxu0 0.0
        %848 = vmatprep.mubr.f32.mxu0 0.0
        %849 = vmatmul.mubr.f32.gmra.mrb[0].mxu0 %v760
        %v850 = vpop.f32.mrb[0].mxu0
        %v851 = vadd.f32 %v782, %v850
        %v852 = vpop.f32.mrb[0].mxu0
        %853 = vdwg.mxu0
        %v854 = vld [vmem:[%s544] sm:$0xff]
        %v855 = vmul.f32 %v854, %v854
        %vm856 = vcmask 23552
        %v857 = vsel %vm856, %v855, 0.0
        %858 = vadd.xlane.f32.xlu0 %v857
        %v859 = vpop.xlane.xlu0 %858
        %v860 = vmul.f32 %v851, %v851
        %v861 = vmul.f32 %v859, %v860
        %v862 = vld [vmem:[#allocation11] sm:$0xff]
        %v863 = vld [vmem:[#allocation11 + $0x8] sm:$0xff]
        %v864 = vld [vmem:[#allocation11 + $0x10] sm:$0xff]
        %v865 = vld [vmem:[#allocation11 + $0x18] sm:$0xff]
        %v866 = vld [vmem:[#allocation11 + $0x20] sm:$0xff]
        %v867 = vld [vmem:[#allocation11 + $0x28] sm:$0xff]
        %v868 = vld [vmem:[#allocation11 + $0x30] sm:$0xff]
        %v869 = vld [vmem:[#allocation11 + $0x38] sm:$0xff]
        %v870 = vld [vmem:[#allocation11 + $0x40] sm:$0xff]
        %v871 = vld [vmem:[#allocation11 + $0x48] sm:$0xff]
        %v872 = vld [vmem:[#allocation11 + $0x50] sm:$0xff]
        %v873 = vld [vmem:[#allocation11 + $0x58] sm:$0xff]
        %v874 = vld [vmem:[#allocation11 + $0x60] sm:$0xff]
        %v875 = vld [vmem:[#allocation11 + $0x68] sm:$0xff]
        %v876 = vld [vmem:[#allocation11 + $0x70] sm:$0xff]
        %v877 = vld [vmem:[#allocation11 + $0x78] sm:$0xff]
        %v878 = vld [vmem:[#allocation13] sm:$0xff]
        %v879 = vld [vmem:[#allocation13 + $0x8] sm:$0xff]
        %v880 = vld [vmem:[#allocation13 + $0x10] sm:$0xff]
        %v881 = vld [vmem:[#allocation13 + $0x18] sm:$0xff]
        %v882 = vld [vmem:[#allocation13 + $0x20] sm:$0xff]
        %v883 = vld [vmem:[#allocation13 + $0x28] sm:$0xff]
        %v884 = vld [vmem:[#allocation13 + $0x30] sm:$0xff]
        %v885 = vld [vmem:[#allocation13 + $0x38] sm:$0xff]
        %v886 = vld [vmem:[#allocation13 + $0x40] sm:$0xff]
        %v887 = vld [vmem:[#allocation13 + $0x48] sm:$0xff]
        %v888 = vld [vmem:[#allocation13 + $0x50] sm:$0xff]
        %v889 = vld [vmem:[#allocation13 + $0x58] sm:$0xff]
        %v890 = vld [vmem:[#allocation13 + $0x60] sm:$0xff]
        %v891 = vld [vmem:[#allocation13 + $0x68] sm:$0xff]
        %v892 = vld [vmem:[#allocation13 + $0x70] sm:$0xff]
        %v893 = vld [vmem:[#allocation13 + $0x78] sm:$0xff]
        %894 = vmatprep.subr.mxu0 0.0
        %895 = vmatpush1.msra.mxu0 %v878
        %896 = vmatprep.subr.mxu0 0.0
        %897 = vmatpush1.msra.mxu0 %v879
        %898 = vmatprep.subr.mxu0 0.0
        %899 = vmatpush1.msra.mxu0 %v880
        %900 = vmatprep.subr.mxu0 0.0
        %901 = vmatpush1.msra.mxu0 %v881
        %902 = vmatprep.subr.mxu0 0.0
        %903 = vmatpush1.msra.mxu0 %v882
        %904 = vmatprep.subr.mxu0 0.0
        %905 = vmatpush1.msra.mxu0 %v883
        %906 = vmatprep.subr.mxu0 0.0
        %907 = vmatpush1.msra.mxu0 %v884
        %908 = vmatprep.subr.mxu0 0.0
        %909 = vmatpush1.msra.mxu0 %v885
        %910 = vmatprep.subr.mxu0 0.0
        %911 = vmatpush1.msra.mxu0 %v886
        %912 = vmatprep.subr.mxu0 0.0
        %913 = vmatpush1.msra.mxu0 %v887
        %914 = vmatprep.subr.mxu0 0.0
        %915 = vmatpush1.msra.mxu0 %v888
        %916 = vmatprep.subr.mxu0 0.0
        %917 = vmatpush1.msra.mxu0 %v889
        %918 = vmatprep.subr.mxu0 0.0
        %919 = vmatpush1.msra.mxu0 %v890
        %920 = vmatprep.subr.mxu0 0.0
        %921 = vmatpush1.msra.mxu0 %v891
        %922 = vmatprep.subr.mxu0 0.0
        %923 = vmatpush1.msra.mxu0 %v892
        %924 = vmatprep.subr.mxu0 0.0
        %925 = vmatpush1.msra.mxu0 %v893
        %926 = vmatprep.subr.mxu0 0.0
        %927 = vmatpush1.msra.mxu0 0.0
        %928 = vmatprep.subr.mxu0 0.0
        %929 = vmatpush1.msra.mxu0 0.0
        %930 = vmatprep.subr.mxu0 0.0
        %931 = vmatpush1.msra.mxu0 0.0
        %932 = vmatprep.subr.mxu0 0.0
        %933 = vmatpush1.msra.mxu0 0.0
        %934 = vmatprep.subr.mxu0 0.0
        %935 = vmatpush1.msra.mxu0 0.0
        %936 = vmatprep.subr.mxu0 0.0
        %937 = vmatpush1.msra.mxu0 0.0
        %938 = vmatprep.subr.mxu0 0.0
        %939 = vmatpush1.msra.mxu0 0.0
        %940 = vmatprep.subr.mxu0 0.0
        %941 = vmatpush1.msra.mxu0 0.0
        %942 = vmatprep.subr.mxu0 0.0
        %943 = vmatpush1.msra.mxu0 0.0
        %944 = vmatprep.subr.mxu0 0.0
        %945 = vmatpush1.msra.mxu0 0.0
        %946 = vmatprep.subr.mxu0 0.0
        %947 = vmatpush1.msra.mxu0 0.0
        %948 = vmatprep.subr.mxu0 0.0
        %949 = vmatpush1.msra.mxu0 0.0
        %950 = vmatprep.subr.mxu0 0.0
        %951 = vmatpush1.msra.mxu0 0.0
        %952 = vmatprep.subr.mxu0 0.0
        %953 = vmatpush1.msra.mxu0 0.0
        %954 = vmatprep.subr.mxu0 0.0
        %955 = vmatpush1.msra.mxu0 0.0
        %956 = vmatprep.subr.mxu0 0.0
        %957 = vmatpush1.msra.mxu0 0.0
        %958 = vmatprep.mubr.f32.mxu0 0.0
        %959 = vmatmul.mubr.f32.gmra.mrb[0].mxu0 %v861
        %v960 = vpop.f32.mrb[0].mxu0
        %v961 = vadd.f32 0.0, %v960
        %v962 = vpop.f32.mrb[0].mxu0
        %963 = vdwg.mxu0
        %964 = vmatprep.subr.mxu0 0.0
        %965 = vmatpush1.msra.mxu0 %v862
        %966 = vmatprep.subr.mxu0 0.0
        %967 = vmatpush1.msra.mxu0 %v863
        %968 = vmatprep.subr.mxu0 0.0
        %969 = vmatpush1.msra.mxu0 %v864
        %970 = vmatprep.subr.mxu0 0.0
        %971 = vmatpush1.msra.mxu0 %v865
        %972 = vmatprep.subr.mxu0 0.0
        %973 = vmatpush1.msra.mxu0 %v866
        %974 = vmatprep.subr.mxu0 0.0
        %975 = vmatpush1.msra.mxu0 %v867
        %976 = vmatprep.subr.mxu0 0.0
        %977 = vmatpush1.msra.mxu0 %v868
        %978 = vmatprep.subr.mxu0 0.0
        %979 = vmatpush1.msra.mxu0 %v869
        %980 = vmatprep.subr.mxu0 0.0
        %981 = vmatpush1.msra.mxu0 %v870
        %982 = vmatprep.subr.mxu0 0.0
        %983 = vmatpush1.msra.mxu0 %v871
        %984 = vmatprep.subr.mxu0 0.0
        %985 = vmatpush1.msra.mxu0 %v872
        %986 = vmatprep.subr.mxu0 0.0
        %987 = vmatpush1.msra.mxu0 %v873
        %988 = vmatprep.subr.mxu0 0.0
        %989 = vmatpush1.msra.mxu0 %v874
        %990 = vmatprep.subr.mxu0 0.0
        %991 = vmatpush1.msra.mxu0 %v875
        %992 = vmatprep.subr.mxu0 0.0
        %993 = vmatpush1.msra.mxu0 %v876
        %994 = vmatprep.subr.mxu0 0.0
        %995 = vmatpush1.msra.mxu0 %v877
        %996 = vmatprep.subr.mxu0 0.0
        %997 = vmatpush1.msra.mxu0 0.0
        %998 = vmatprep.subr.mxu0 0.0
        %999 = vmatpush1.msra.mxu0 0.0
        %1000 = vmatprep.subr.mxu0 0.0
        %1001 = vmatpush1.msra.mxu0 0.0
        %1002 = vmatprep.subr.mxu0 0.0
        %1003 = vmatpush1.msra.mxu0 0.0
        %1004 = vmatprep.subr.mxu0 0.0
        %1005 = vmatpush1.msra.mxu0 0.0
        %1006 = vmatprep.subr.mxu0 0.0
        %1007 = vmatpush1.msra.mxu0 0.0
        %1008 = vmatprep.subr.mxu0 0.0
        %1009 = vmatpush1.msra.mxu0 0.0
        %1010 = vmatprep.subr.mxu0 0.0
        %1011 = vmatpush1.msra.mxu0 0.0
        %1012 = vmatprep.subr.mxu0 0.0
        %1013 = vmatpush1.msra.mxu0 0.0
        %1014 = vmatprep.subr.mxu0 0.0
        %1015 = vmatpush1.msra.mxu0 0.0
        %1016 = vmatprep.subr.mxu0 0.0
        %1017 = vmatpush1.msra.mxu0 0.0
        %1018 = vmatprep.subr.mxu0 0.0
        %1019 = vmatpush1.msra.mxu0 0.0
        %1020 = vmatprep.subr.mxu0 0.0
        %1021 = vmatpush1.msra.mxu0 0.0
        %1022 = vmatprep.subr.mxu0 0.0
        %1023 = vmatpush1.msra.mxu0 0.0
        %1024 = vmatprep.subr.mxu0 0.0
        %1025 = vmatpush1.msra.mxu0 0.0
        %1026 = vmatprep.subr.mxu0 0.0
        %1027 = vmatpush1.msra.mxu0 0.0
        %1028 = vmatprep.mubr.f32.mxu0 0.0
        %1029 = vmatmul.mubr.f32.gmra.mrb[0].mxu0 %v851
        %v1030 = vpop.f32.mrb[0].mxu0
        %v1031 = vadd.f32 %v961, %v1030
        %v1032 = vpop.f32.mrb[0].mxu0
        %1033 = vdwg.mxu0
        %v1034 = vld [vmem:[%s10] sm:$0x1]
        %v1036 = vlaneseq
        %v1037 = vshrl.u32 %v1036, 7
        %v1038 = vsub.s32 0, %v1037
        %v1039 = vrot.slane %v1034, %v1038
        %v1041 = vadd.f32 %v1031, %v1039
        %v1042 = vxor.u32 %v1041, 2147483648
        %v1043 = vmul.f32 %v1042, 1.442695
        %v1044 = vpow.pop %v1043
        %v1045 = vadd.f32 %v1044, 1.0
        %v1046 = vrcp.pop %v1045
        %v1047 = vmul.f32 1.0, %v1046
        %v1048 = vmul.f32 %v1041, %v1047
        %v1049 = vld [vmem:[%s540] sm:$0xff]
        %1050 = vset.pattern.permute.xlu0 0
        %1051 = vperm.xlu0 %1050, %v1049
        %v1052 = vpop.permute.xlu0 %1051
        %vm1053 = vcmp.eq.s32.totalorder %v1052, %v568
        %v1054 = vsel %vm1053, 1, 0
        %v1055 = vcvt.s32.f32 %v1054
        %v1056 = vld [vmem:[#allocation2] sm:$0xff]
        %v1057 = vld [vmem:[#allocation2 + $0x8] sm:$0xff]
        %v1058 = vld [vmem:[#allocation2 + $0x10] sm:$0xff]
        %v1059 = vld [vmem:[#allocation2 + $0x18] sm:$0xff]
        %v1060 = vld [vmem:[#allocation2 + $0x20] sm:$0xff]
        %v1061 = vld [vmem:[#allocation2 + $0x28] sm:$0xff]
        %v1062 = vld [vmem:[#allocation2 + $0x30] sm:$0xff]
        %v1063 = vld [vmem:[#allocation2 + $0x38] sm:$0xff]
        %v1064 = vld [vmem:[#allocation2 + $0x40] sm:$0xff]
        %v1065 = vld [vmem:[#allocation2 + $0x48] sm:$0xff]
        %v1066 = vld [vmem:[#allocation2 + $0x50] sm:$0xff]
        %v1067 = vld [vmem:[#allocation2 + $0x58] sm:$0xff]
        %v1068 = vld [vmem:[#allocation2 + $0x60] sm:$0xff]
        %v1069 = vld [vmem:[#allocation2 + $0x68] sm:$0xff]
        %v1070 = vld [vmem:[#allocation2 + $0x70] sm:$0xff]
        %v1071 = vld [vmem:[#allocation2 + $0x78] sm:$0xff]
        %1072 = vxpose.xlu0.b32.start [1/16] %v1048, 128
        %1073 = vxpose.xlu0.b32.cont [2/16] 0.0, 128
        %1074 = vxpose.xlu0.b32.cont [3/16] 0.0, 128
        %1075 = vxpose.xlu0.b32.cont [4/16] 0.0, 128
        %1076 = vxpose.xlu0.b32.cont [5/16] 0.0, 128
        %1077 = vxpose.xlu0.b32.cont [6/16] 0.0, 128
        %1078 = vxpose.xlu0.b32.cont [7/16] 0.0, 128
        %1079 = vxpose.xlu0.b32.cont [8/16] 0.0, 128
        %1080 = vxpose.xlu0.b32.cont [9/16] 0.0, 128
        %1081 = vxpose.xlu0.b32.cont [10/16] 0.0, 128
        %1082 = vxpose.xlu0.b32.cont [11/16] 0.0, 128
        %1083 = vxpose.xlu0.b32.cont [12/16] 0.0, 128
        %1084 = vxpose.xlu0.b32.cont [13/16] 0.0, 128
        %1085 = vxpose.xlu0.b32.cont [14/16] 0.0, 128
        %1086 = vxpose.xlu0.b32.cont [15/16] 0.0, 128
        %1087 = vxpose.xlu0.b32.end [16/16] 0.0, 128
        %v1088 = vpop.trf.xlu0
        %v1089 = vpop.trf.xlu0
        %v1090 = vpop.trf.xlu0
        %v1091 = vpop.trf.xlu0
        %v1092 = vpop.trf.xlu0
        %v1093 = vpop.trf.xlu0
        %v1094 = vpop.trf.xlu0
        %v1095 = vpop.trf.xlu0
        %v1096 = vpop.trf.xlu0
        %v1097 = vpop.trf.xlu0
        %v1098 = vpop.trf.xlu0
        %v1099 = vpop.trf.xlu0
        %v1100 = vpop.trf.xlu0
        %v1101 = vpop.trf.xlu0
        %v1102 = vpop.trf.xlu0
        %v1103 = vpop.trf.xlu0
        %vm1104 = vcmask 64512
        %v1106 = vsel %vm1104, %v1088, 0
        %v1109 = vsel %vm1104, %v1089, 0
        %v1112 = vsel %vm1104, %v1090, 0
        %v1115 = vsel %vm1104, %v1091, 0
        %v1118 = vsel %vm1104, %v1092, 0
        %v1121 = vsel %vm1104, %v1093, 0
        %v1124 = vsel %vm1104, %v1094, 0
        %v1127 = vsel %vm1104, %v1095, 0
        %v1130 = vsel %vm1104, %v1096, 0
        %v1133 = vsel %vm1104, %v1097, 0
        %v1136 = vsel %vm1104, %v1098, 0
        %v1139 = vsel %vm1104, %v1099, 0
        %v1142 = vsel %vm1104, %v1100, 0
        %v1145 = vsel %vm1104, %v1101, 0
        %v1148 = vsel %vm1104, %v1102, 0
        %v1151 = vsel %vm1104, %v1103, 0
        %1153 = vmatprep.subr.mxu0 0.0
        %1154 = vmatpush1.msra.mxu0 %v1055
        %1155 = vmatprep.subr.mxu0 0.0
        %1156 = vmatpush1.msra.mxu0 0.0
        %1157 = vmatprep.subr.mxu0 0.0
        %1158 = vmatpush1.msra.mxu0 0.0
        %1159 = vmatprep.subr.mxu0 0.0
        %1160 = vmatpush1.msra.mxu0 0.0
        %1161 = vmatprep.subr.mxu0 0.0
        %1162 = vmatpush1.msra.mxu0 0.0
        %1163 = vmatprep.subr.mxu0 0.0
        %1164 = vmatpush1.msra.mxu0 0.0
        %1165 = vmatprep.subr.mxu0 0.0
        %1166 = vmatpush1.msra.mxu0 0.0
        %1167 = vmatprep.subr.mxu0 0.0
        %1168 = vmatpush1.msra.mxu0 0.0
        %1169 = vmatprep.subr.mxu0 0.0
        %1170 = vmatpush1.msra.mxu0 0.0
        %1171 = vmatprep.subr.mxu0 0.0
        %1172 = vmatpush1.msra.mxu0 0.0
        %1173 = vmatprep.subr.mxu0 0.0
        %1174 = vmatpush1.msra.mxu0 0.0
        %1175 = vmatprep.subr.mxu0 0.0
        %1176 = vmatpush1.msra.mxu0 0.0
        %1177 = vmatprep.subr.mxu0 0.0
        %1178 = vmatpush1.msra.mxu0 0.0
        %1179 = vmatprep.subr.mxu0 0.0
        %1180 = vmatpush1.msra.mxu0 0.0
        %1181 = vmatprep.subr.mxu0 0.0
        %1182 = vmatpush1.msra.mxu0 0.0
        %1183 = vmatprep.subr.mxu0 0.0
        %1184 = vmatpush1.msra.mxu0 0.0
        %1185 = vmatprep.subr.mxu0 0.0
        %1186 = vmatpush1.msra.mxu0 0.0
        %1187 = vmatprep.subr.mxu0 0.0
        %1188 = vmatpush1.msra.mxu0 0.0
        %1189 = vmatprep.subr.mxu0 0.0
        %1190 = vmatpush1.msra.mxu0 0.0
        %1191 = vmatprep.subr.mxu0 0.0
        %1192 = vmatpush1.msra.mxu0 0.0
        %1193 = vmatprep.subr.mxu0 0.0
        %1194 = vmatpush1.msra.mxu0 0.0
        %1195 = vmatprep.subr.mxu0 0.0
        %1196 = vmatpush1.msra.mxu0 0.0
        %1197 = vmatprep.subr.mxu0 0.0
        %1198 = vmatpush1.msra.mxu0 0.0
        %1199 = vmatprep.subr.mxu0 0.0
        %1200 = vmatpush1.msra.mxu0 0.0
        %1201 = vmatprep.subr.mxu0 0.0
        %1202 = vmatpush1.msra.mxu0 0.0
        %1203 = vmatprep.subr.mxu0 0.0
        %1204 = vmatpush1.msra.mxu0 0.0
        %1205 = vmatprep.subr.mxu0 0.0
        %1206 = vmatpush1.msra.mxu0 0.0
        %1207 = vmatprep.subr.mxu0 0.0
        %1208 = vmatpush1.msra.mxu0 0.0
        %1209 = vmatprep.subr.mxu0 0.0
        %1210 = vmatpush1.msra.mxu0 0.0
        %1211 = vmatprep.subr.mxu0 0.0
        %1212 = vmatpush1.msra.mxu0 0.0
        %1213 = vmatprep.subr.mxu0 0.0
        %1214 = vmatpush1.msra.mxu0 0.0
        %1215 = vmatprep.subr.mxu0 0.0
        %1216 = vmatpush1.msra.mxu0 0.0
        %1217 = vmatprep.mubr.f32.mxu0 0.0
        %1218 = vmatmul.mubr.f32.gmra.mrb[0].mxu0 %v1106
        %v1219 = vpop.f32.mrb[0].mxu0
        %v1220 = vadd.f32 0.0, %v1219
        %v1221 = vpop.f32.mrb[0].mxu0
        %1222 = vmatprep.mubr.f32.mxu0 0.0
        %1223 = vmatmul.mubr.f32.gmra.mrb[0].mxu0 %v1109
        %v1224 = vpop.f32.mrb[0].mxu0
        %v1225 = vadd.f32 0.0, %v1224
        %v1226 = vpop.f32.mrb[0].mxu0
        %1227 = vmatprep.mubr.f32.mxu0 0.0
        %1228 = vmatmul.mubr.f32.gmra.mrb[0].mxu0 %v1112
        %v1229 = vpop.f32.mrb[0].mxu0
        %v1230 = vadd.f32 0.0, %v1229
        %v1231 = vpop.f32.mrb[0].mxu0
        %1232 = vmatprep.mubr.f32.mxu0 0.0
        %1233 = vmatmul.mubr.f32.gmra.mrb[0].mxu0 %v1115
        %v1234 = vpop.f32.mrb[0].mxu0
        %v1235 = vadd.f32 0.0, %v1234
        %v1236 = vpop.f32.mrb[0].mxu0
        %1237 = vmatprep.mubr.f32.mxu0 0.0
        %1238 = vmatmul.mubr.f32.gmra.mrb[0].mxu0 %v1118
        %v1239 = vpop.f32.mrb[0].mxu0
        %v1240 = vadd.f32 0.0, %v1239
        %v1241 = vpop.f32.mrb[0].mxu0
        %1242 = vmatprep.mubr.f32.mxu0 0.0
        %1243 = vmatmul.mubr.f32.gmra.mrb[0].mxu0 %v1121
        %v1244 = vpop.f32.mrb[0].mxu0
        %v1245 = vadd.f32 0.0, %v1244
        %v1246 = vpop.f32.mrb[0].mxu0
        %1247 = vmatprep.mubr.f32.mxu0 0.0
        %1248 = vmatmul.mubr.f32.gmra.mrb[0].mxu0 %v1124
        %v1249 = vpop.f32.mrb[0].mxu0
        %v1250 = vadd.f32 0.0, %v1249
        %v1251 = vpop.f32.mrb[0].mxu0
        %1252 = vmatprep.mubr.f32.mxu0 0.0
        %1253 = vmatmul.mubr.f32.gmra.mrb[0].mxu0 %v1127
        %v1254 = vpop.f32.mrb[0].mxu0
        %v1255 = vadd.f32 0.0, %v1254
        %v1256 = vpop.f32.mrb[0].mxu0
        %1257 = vmatprep.mubr.f32.mxu0 0.0
        %1258 = vmatmul.mubr.f32.gmra.mrb[0].mxu0 %v1130
        %v1259 = vpop.f32.mrb[0].mxu0
        %v1260 = vadd.f32 0.0, %v1259
        %v1261 = vpop.f32.mrb[0].mxu0
        %1262 = vmatprep.mubr.f32.mxu0 0.0
        %1263 = vmatmul.mubr.f32.gmra.mrb[0].mxu0 %v1133
        %v1264 = vpop.f32.mrb[0].mxu0
        %v1265 = vadd.f32 0.0, %v1264
        %v1266 = vpop.f32.mrb[0].mxu0
        %1267 = vmatprep.mubr.f32.mxu0 0.0
        %1268 = vmatmul.mubr.f32.gmra.mrb[0].mxu0 %v1136
        %v1269 = vpop.f32.mrb[0].mxu0
        %v1270 = vadd.f32 0.0, %v1269
        %v1271 = vpop.f32.mrb[0].mxu0
        %1272 = vmatprep.mubr.f32.mxu0 0.0
        %1273 = vmatmul.mubr.f32.gmra.mrb[0].mxu0 %v1139
        %v1274 = vpop.f32.mrb[0].mxu0
        %v1275 = vadd.f32 0.0, %v1274
        %v1276 = vpop.f32.mrb[0].mxu0
        %1277 = vmatprep.mubr.f32.mxu0 0.0
        %1278 = vmatmul.mubr.f32.gmra.mrb[0].mxu0 %v1142
        %v1279 = vpop.f32.mrb[0].mxu0
        %v1280 = vadd.f32 0.0, %v1279
        %v1281 = vpop.f32.mrb[0].mxu0
        %1282 = vmatprep.mubr.f32.mxu0 0.0
        %1283 = vmatmul.mubr.f32.gmra.mrb[0].mxu0 %v1145
        %v1284 = vpop.f32.mrb[0].mxu0
        %v1285 = vadd.f32 0.0, %v1284
        %v1286 = vpop.f32.mrb[0].mxu0
        %1287 = vmatprep.mubr.f32.mxu0 0.0
        %1288 = vmatmul.mubr.f32.gmra.mrb[0].mxu0 %v1148
        %v1289 = vpop.f32.mrb[0].mxu0
        %v1290 = vadd.f32 0.0, %v1289
        %v1291 = vpop.f32.mrb[0].mxu0
        %1292 = vmatprep.mubr.f32.mxu0 0.0
        %1293 = vmatmul.mubr.f32.gmra.mrb[0].mxu0 %v1151
        %v1294 = vpop.f32.mrb[0].mxu0
        %v1295 = vadd.f32 0.0, %v1294
        %v1296 = vpop.f32.mrb[0].mxu0
        %1297 = vdwg.mxu0
        %v1298 = vadd.f32 %v1056, %v1220
        %v1299 = vadd.f32 %v1057, %v1225
        %v1300 = vadd.f32 %v1058, %v1230
        %v1301 = vadd.f32 %v1059, %v1235
        %v1302 = vadd.f32 %v1060, %v1240
        %v1303 = vadd.f32 %v1061, %v1245
        %v1304 = vadd.f32 %v1062, %v1250
        %v1305 = vadd.f32 %v1063, %v1255
        %v1306 = vadd.f32 %v1064, %v1260
        %v1307 = vadd.f32 %v1065, %v1265
        %v1308 = vadd.f32 %v1066, %v1270
        %v1309 = vadd.f32 %v1067, %v1275
        %v1310 = vadd.f32 %v1068, %v1280
        %v1311 = vadd.f32 %v1069, %v1285
        %v1312 = vadd.f32 %v1070, %v1290
        %v1313 = vadd.f32 %v1071, %v1295
        %1314 = vst [vmem:[#allocation2] sm:$0xff] %v1298
        %1315 = vst [vmem:[#allocation2 + $0x8] sm:$0xff] %v1299
        %1316 = vst [vmem:[#allocation2 + $0x10] sm:$0xff] %v1300
        %1317 = vst [vmem:[#allocation2 + $0x18] sm:$0xff] %v1301
        %1318 = vst [vmem:[#allocation2 + $0x20] sm:$0xff] %v1302
        %1319 = vst [vmem:[#allocation2 + $0x28] sm:$0xff] %v1303
        %1320 = vst [vmem:[#allocation2 + $0x30] sm:$0xff] %v1304
        %1321 = vst [vmem:[#allocation2 + $0x38] sm:$0xff] %v1305
        %1322 = vst [vmem:[#allocation2 + $0x40] sm:$0xff] %v1306
        %1323 = vst [vmem:[#allocation2 + $0x48] sm:$0xff] %v1307
        %1324 = vst [vmem:[#allocation2 + $0x50] sm:$0xff] %v1308
        %1325 = vst [vmem:[#allocation2 + $0x58] sm:$0xff] %v1309
        %1326 = vst [vmem:[#allocation2 + $0x60] sm:$0xff] %v1310
        %1327 = vst [vmem:[#allocation2 + $0x68] sm:$0xff] %v1311
        %1328 = vst [vmem:[#allocation2 + $0x70] sm:$0xff] %v1312
        %1329 = vst [vmem:[#allocation2 + $0x78] sm:$0xff] %v1313
        %v1330 = vld [vmem:[#allocation3] sm:$0x1]
        %v1331 = vrot.slane %v1055, 4
        %v1332 = vadd.f32 %v1055, %v1331
        %v1333 = vrot.slane %v1332, 2
        %v1334 = vadd.f32 %v1332, %v1333
        %v1335 = vrot.slane %v1334, 1
        %v1336 = vadd.f32 %v1334, %v1335
        %v1337 = vadd.f32 %v1330, %v1336
        %1338 = vst [vmem:[#allocation3] sm:$0x1] %v1337
        %p1339 = scmp.eq.s32.totalorder %s29, 2
        // Predicated region
        $region101: #{tpu_custom_call.1} parent=71 // pred_check
          %p1340 = pneg %p1339
        $region102: #{tpu_custom_call.1} parent=71 // pred_check_branch
          %1342 = sbr.rel (%p1340) target = $region104
        $region103: #{tpu_custom_call.1} parent=71 // pred_region
          %v1343 = vld [vmem:[%s11] sm:$0x1]
          %v1344 = vld [vmem:[#allocation2] sm:$0xff]
          %v1345 = vld [vmem:[#allocation2 + $0x8] sm:$0xff]
          %v1346 = vld [vmem:[#allocation2 + $0x10] sm:$0xff]
          %v1347 = vld [vmem:[#allocation2 + $0x18] sm:$0xff]
          %v1348 = vld [vmem:[#allocation2 + $0x20] sm:$0xff]
          %v1349 = vld [vmem:[#allocation2 + $0x28] sm:$0xff]
          %v1350 = vld [vmem:[#allocation2 + $0x30] sm:$0xff]
          %v1351 = vld [vmem:[#allocation2 + $0x38] sm:$0xff]
          %v1352 = vld [vmem:[#allocation2 + $0x40] sm:$0xff]
          %v1353 = vld [vmem:[#allocation2 + $0x48] sm:$0xff]
          %v1354 = vld [vmem:[#allocation2 + $0x50] sm:$0xff]
          %v1355 = vld [vmem:[#allocation2 + $0x58] sm:$0xff]
          %v1356 = vld [vmem:[#allocation2 + $0x60] sm:$0xff]
          %v1357 = vld [vmem:[#allocation2 + $0x68] sm:$0xff]
          %v1358 = vld [vmem:[#allocation2 + $0x70] sm:$0xff]
          %v1359 = vld [vmem:[#allocation2 + $0x78] sm:$0xff]
          %s1360 = sld [smem:[#allocation14]]
          %v1361 = vld [vmem:[#allocation3] sm:$0x1]
          %v1362 = vstv %s1360
          %v1363 = vmul.f32 %v1362, %v1361
          %1364 = vmatprep.subr.mxu0 0.0
          %1365 = vmatpush1.msra.mxu0 %v1344
          %1366 = vmatprep.subr.mxu0 0.0
          %1367 = vmatpush1.msra.mxu0 %v1345
          %1368 = vmatprep.subr.mxu0 0.0
          %1369 = vmatpush1.msra.mxu0 %v1346
          %1370 = vmatprep.subr.mxu0 0.0
          %1371 = vmatpush1.msra.mxu0 %v1347
          %1372 = vmatprep.subr.mxu0 0.0
          %1373 = vmatpush1.msra.mxu0 %v1348
          %1374 = vmatprep.subr.mxu0 0.0
          %1375 = vmatpush1.msra.mxu0 %v1349
          %1376 = vmatprep.subr.mxu0 0.0
          %1377 = vmatpush1.msra.mxu0 %v1350
          %1378 = vmatprep.subr.mxu0 0.0
          %1379 = vmatpush1.msra.mxu0 %v1351
          %1380 = vmatprep.subr.mxu0 0.0
          %1381 = vmatpush1.msra.mxu0 %v1352
          %1382 = vmatprep.subr.mxu0 0.0
          %1383 = vmatpush1.msra.mxu0 %v1353
          %1384 = vmatprep.subr.mxu0 0.0
          %1385 = vmatpush1.msra.mxu0 %v1354
          %1386 = vmatprep.subr.mxu0 0.0
          %1387 = vmatpush1.msra.mxu0 %v1355
          %1388 = vmatprep.subr.mxu0 0.0
          %1389 = vmatpush1.msra.mxu0 %v1356
          %1390 = vmatprep.subr.mxu0 0.0
          %1391 = vmatpush1.msra.mxu0 %v1357
          %1392 = vmatprep.subr.mxu0 0.0
          %1393 = vmatpush1.msra.mxu0 %v1358
          %1394 = vmatprep.subr.mxu0 0.0
          %1395 = vmatpush1.msra.mxu0 %v1359
          %1396 = vmatprep.subr.mxu0 0.0
          %1397 = vmatpush1.msra.mxu0 0.0
          %1398 = vmatprep.subr.mxu0 0.0
          %1399 = vmatpush1.msra.mxu0 0.0
          %1400 = vmatprep.subr.mxu0 0.0
          %1401 = vmatpush1.msra.mxu0 0.0
          %1402 = vmatprep.subr.mxu0 0.0
          %1403 = vmatpush1.msra.mxu0 0.0
          %1404 = vmatprep.subr.mxu0 0.0
          %1405 = vmatpush1.msra.mxu0 0.0
          %1406 = vmatprep.subr.mxu0 0.0
          %1407 = vmatpush1.msra.mxu0 0.0
          %1408 = vmatprep.subr.mxu0 0.0
          %1409 = vmatpush1.msra.mxu0 0.0
          %1410 = vmatprep.subr.mxu0 0.0
          %1411 = vmatpush1.msra.mxu0 0.0
          %1412 = vmatprep.subr.mxu0 0.0
          %1413 = vmatpush1.msra.mxu0 0.0
          %1414 = vmatprep.subr.mxu0 0.0
          %1415 = vmatpush1.msra.mxu0 0.0
          %1416 = vmatprep.subr.mxu0 0.0
          %1417 = vmatpush1.msra.mxu0 0.0
          %1418 = vmatprep.subr.mxu0 0.0
          %1419 = vmatpush1.msra.mxu0 0.0
          %1420 = vmatprep.subr.mxu0 0.0
          %1421 = vmatpush1.msra.mxu0 0.0
          %1422 = vmatprep.subr.mxu0 0.0
          %1423 = vmatpush1.msra.mxu0 0.0
          %1424 = vmatprep.subr.mxu0 0.0
          %1425 = vmatpush1.msra.mxu0 0.0
          %1426 = vmatprep.subr.mxu0 0.0
          %1427 = vmatpush1.msra.mxu0 0.0
          %1428 = vmatprep.mubr.f32.mxu0 0.0
          %1429 = vmatmul.mubr.f32.gmra.mrb[0].mxu0 %v1343
          %v1430 = vpop.f32.mrb[0].mxu0
          %v1431 = vadd.f32 %v1363, %v1430
          %v1432 = vpop.f32.mrb[0].mxu0
          %1433 = vdwg.mxu0
          %s1434 = sld [smem:[#allocation14 + $0x1]]
          %v1435 = vstv %s1434
          %v1436 = vadd.f32 %v1431, %v1435
          %1437 = vst [vmem:[#allocation15] sm:$0x1] %v1436
        $region104: #{tpu_custom_call.1} parent=71 // pred_fallthru
          _
        // Predicated region
        $region105: #{tpu_custom_call.1} parent=71 // pred_check
          %p1438 = pneg %p330
        $region106: #{tpu_custom_call.1} parent=71 // pred_check_branch
          %1440 = sbr.rel (%p1438) target = $region108
        $region107: #{tpu_custom_call.1} parent=71 // pred_region
          %s1442 = ssub.s32 16, 16
          %1443 = vsyncadd [#allocation6], %s1442
          %s1445 = sshll.u32 [#allocation15], 4
          %s1446 = int_to_ptr.vmem [resolvable:$true] %s1445
          %1448 = dma.vmem_to_hbm [thread:$0]  %s1446, 16, %s13, [#allocation6]
        $region108: #{tpu_custom_call.1} parent=71 // pred_fallthru
          _
        // Predicated region
        $region109: #{tpu_custom_call.1} parent=71 // pred_check
          %p1449 = pneg %p330
        $region110: #{tpu_custom_call.1} parent=71 // pred_check_branch
          %1451 = sbr.rel (%p1449) target = $region112
        $region111: #{tpu_custom_call.1} parent=71 // pred_region
          %1452 = dma.done [#allocation6], 16
        $region112: #{tpu_custom_call.1} parent=71 // pred_fallthru
          _
      $region72: #{tpu_custom_call.1} parent=5 // pred_fallthru
        _
      %p1453 = scmp.le.s32.totalorder 2, %s24
      // Predicated region
      $region113: #{tpu_custom_call.1} parent=5 // pred_check
        %p1454 = pneg %p1453
      $region114: #{tpu_custom_call.1} parent=5 // pred_check_branch
        %1456 = sbr.rel (%p1454) target = $region116
      $region115: #{tpu_custom_call.1} parent=5 // pred_region
        %s1457 = ssub.s32 %s24, 2
      $region116: #{tpu_custom_call.1} parent=5 // pred_fallthru
        _
    $region6: #{tpu_custom_call.1} parent=1 // loop_footer
      %s28 = sadd.s32 1, %s24
    $region7: #{tpu_custom_call.1} parent=1 // loop_footer_branch
      %23 = sbr.rel target = $region3
    $region8: #{tpu_custom_call.1} parent=1 // loop_exit
      _
    %1458 = vsyncpa [#allocation5], 1
    %s1459 = scalar_lea.sflag [#allocation5], 1
    %1460 = vsyncpa %s1459, 1
    %1461 = vsyncpa [#allocation9], 1
    %1462 = vsyncpa [#allocation12], 1
    %1463 = vsyncpa [#allocation6], 1
    %s1464 = scalar_lea.sflag [#allocation6], 1
    %1465 = vsyncpa %s1464, 1
    %1466 = vsyncpa [#allocation7], 1
    %s1467 = scalar_lea.sflag [#allocation7], 1
    %1468 = vsyncpa %s1467, 1

</llo_original>
